<compile_context>
chip_gen: v5e
topology: v5e:2x2
jax: 0.10.0
libtpu: 0.0.40
codegen_flags: <defaults>
</compile_context>

<pallas_src>
import functools

import jax
import jax.numpy as jnp
from jax.experimental import pallas as pl
from jax.experimental.pallas import tpu as pltpu


# ------------------------------ fused kernel -------------------------------- #

def _make_fused_kernel(dims):
    (l0, pad1, k1, stride, l1c, l1p, k2, l2c, l2p, k3, l3c, l3p) = dims

    def conv_bn_relu_pool(in_ref, w_ref, b_ref, ybuf_ref, ksize, strd, l_conv, l_pool):
        """Conv1d as K accumulated tap-matmuls + folded-BN bias + ReLU + MaxPool(2,2,pad=1)."""
        def tap(k):
            if strd == 1:
                return in_ref[pl.ds(k, l_conv), :]
            return in_ref[pl.ds(k, l_conv, stride=strd), :]

        acc = jnp.dot(tap(0), w_ref[0], preferred_element_type=jnp.float32)
        for k in range(1, ksize):
            acc = acc + jnp.dot(tap(k), w_ref[k], preferred_element_type=jnp.float32)
        y = jnp.maximum(acc + b_ref[...], 0.0)          # folded BN bias + ReLU

        # MaxPool1d(2, 2, padding=1) fully in VMEM: stage post-ReLU rows at offset 1
        # inside a zeroed (2*l_pool, C) buffer, then max of even/odd rows (strided reads).
        # Zero padding is equivalent to PyTorch's implicit -inf pad since y >= 0.
        ybuf_ref[...] = jnp.zeros_like(ybuf_ref)
        ybuf_ref[pl.ds(1, l_conv), :] = y
        return jnp.maximum(ybuf_ref[pl.ds(0, l_pool, stride=2), :],
                           ybuf_ref[pl.ds(1, l_pool, stride=2), :])

    def kernel(x_ref, w1_ref, b1_ref, w2_ref, b2_ref, w3_ref, b3_ref, o_ref,
               a0, yb1, a1, yb2, a2, yb3):
        # Layer-1 input with conv zero padding, built directly in VMEM.
        a0[...] = jnp.zeros_like(a0)
        a0[pl.ds(pad1, l0), :] = x_ref[...]

        p1 = conv_bn_relu_pool(a0, w1_ref, b1_ref, yb1, k1, stride, l1c, l1p)
        # Dropout(p): eval mode -> identity.
        a1[...] = jnp.zeros_like(a1)
        a1[pl.ds(k2 // 2, l1p), :] = p1

        p2 = conv_bn_relu_pool(a1, w2_ref, b2_ref, yb2, k2, 1, l2c, l2p)
        a2[...] = jnp.zeros_like(a2)
        a2[pl.ds(k3 // 2, l2p), :] = p2

        p3 = conv_bn_relu_pool(a2, w3_ref, b3_ref, yb3, k3, 1, l3c, l3p)
        o_ref[...] = p3.astype(o_ref.dtype)

    return kernel


# ------------------------------- wrapper ------------------------------------ #

def _fold_bn(w_oik, bn, eps):
    """PyTorch Conv1d weight (C_out, C_in, K) + eval-mode BN -> folded (K, C_in, C_out), (1, C_out)."""
    gamma, beta, mean, var = bn
    s = gamma / jnp.sqrt(var + eps)
    w = jnp.transpose(w_oik, (2, 1, 0)).astype(jnp.float32) * s   # scale folded into weights
    b = (beta - mean * s).reshape(1, -1).astype(jnp.float32)
    return w, b


@functools.partial(jax.jit, static_argnames=("kernel_size", "stride"))
def feature_extractor_1dcnn(params, x_ncl, kernel_size, stride, eps=1e-5):
    bsz, c_in, l0 = x_ncl.shape
    k1, k2, k3 = kernel_size, 8, 8
    pad1 = k1 // 2

    w1, b1 = _fold_bn(params["w1"], params["bn1"], eps)
    w2, b2 = _fold_bn(params["w2"], params["bn2"], eps)
    w3, b3 = _fold_bn(params["w3"], params["bn3"], eps)
    h1, h2, h3 = w1.shape[2], w2.shape[2], w3.shape[2]

    # Layer geometry: Conv1d(pad=K//2) then MaxPool1d(2,2,pad=1) -> L//2 + 1.
    l1c = (l0 + 2 * pad1 - k1) // stride + 1
    l1p = l1c // 2 + 1
    l2c = (l1p + 2 * (k2 // 2) - k2) + 1
    l2p = l2c // 2 + 1
    l3c = (l2p + 2 * (k3 // 2) - k3) + 1
    l3p = l3c // 2 + 1

    x_blc = jnp.transpose(x_ncl, (0, 2, 1)).astype(jnp.float32)   # (B, L, C) channels-last

    kernel = _make_fused_kernel(
        (l0, pad1, k1, stride, l1c, l1p, k2, l2c, l2p, k3, l3c, l3p))

    out = pl.pallas_call(
        kernel,
        out_shape=jax.ShapeDtypeStruct((bsz, l3p, h3), jnp.float32),
        grid=(bsz,),
        in_specs=[
            pl.BlockSpec((None, l0, c_in), lambda i: (i, 0, 0)),     # x (batch squeezed)
            pl.BlockSpec((k1, c_in, h1), lambda i: (0, 0, 0)),       # w1 (DMA'd once)
            pl.BlockSpec((1, h1), lambda i: (0, 0)),                 # b1
            pl.BlockSpec((k2, h1, h2), lambda i: (0, 0, 0)),         # w2
            pl.BlockSpec((1, h2), lambda i: (0, 0)),                 # b2
            pl.BlockSpec((k3, h2, h3), lambda i: (0, 0, 0)),         # w3
            pl.BlockSpec((1, h3), lambda i: (0, 0)),                 # b3
        ],
        out_specs=pl.BlockSpec((None, l3p, h3), lambda i: (i, 0, 0)),
        scratch_shapes=[
            pltpu.VMEM((l0 + 2 * pad1, c_in), jnp.float32),          # a0: padded layer-1 input
            pltpu.VMEM((2 * l1p, h1), jnp.float32),                  # yb1: pool staging
            pltpu.VMEM((l1p + 2 * (k2 // 2), h1), jnp.float32),      # a1: padded layer-2 input
            pltpu.VMEM((2 * l2p, h2), jnp.float32),                  # yb2
            pltpu.VMEM((l2p + 2 * (k3 // 2), h2), jnp.float32),      # a2: padded layer-3 input
            pltpu.VMEM((2 * l3p, h3), jnp.float32),                  # yb3
        ],
        compiler_params=pltpu.CompilerParams(
            dimension_semantics=("parallel",)),
    )(x_blc, w1, b1, w2, b2, w3, b3)

    return jnp.transpose(out, (0, 2, 1))                             # back to PyTorch NCL


# --------------------------- pure-XLA reference ------------------------------ #

def _reference_forward(params, x_ncl, kernel_size, stride, eps=1e-5):
    """XLA replica of the PyTorch module (eval mode) for verification."""
    def block(x, w, bn, ksize, strd):
        gamma, beta, mean, var = bn
        pad = ksize // 2
        y = jax.lax.conv_general_dilated(
            x, w, window_strides=(strd,), padding=[(pad, pad)],
            dimension_numbers=("NCH", "OIH", "NCH"),
            precision=jax.lax.Precision.HIGHEST)
        s = gamma / jnp.sqrt(var + eps)
        y = y * s[None, :, None] + (beta - mean * s)[None, :, None]
        y = jnp.maximum(y, 0.0)
        return jax.lax.reduce_window(
            y, -jnp.inf, jax.lax.max,
            window_dimensions=(1, 1, 2), window_strides=(1, 1, 2),
            padding=((0, 0), (0, 0), (1, 1)))

    x = block(x_ncl, params["w1"], params["bn1"], kernel_size, stride)
    x = block(x, params["w2"], params["bn2"], 8, 1)
    x = block(x, params["w3"], params["bn3"], 8, 1)
    return x


# --------------------------- parameter construction ------------------------- #

def init_params(key, input_channels, num_hidden, kernel_size):
    def conv_w(k, c_out, c_in, ks):
        bound = 1.0 / jnp.sqrt(c_in * ks)
        return jax.random.uniform(k, (c_out, c_in, ks), jnp.float32, -bound, bound)

    def bn_params(k, c):
        k1, k2, k3 = jax.random.split(k, 3)
        gamma = jax.random.uniform(k1, (c,), jnp.float32, 0.5, 1.5)
        beta = 0.1 * jax.random.normal(k2, (c,), jnp.float32)
        mean = 0.1 * jax.random.normal(k3, (c,), jnp.float32)
        var = jnp.ones((c,), jnp.float32)
        return gamma, beta, mean, var

    ks = jax.random.split(key, 6)
    return {
        "w1": conv_w(ks[0], num_hidden, input_channels, kernel_size),
        "bn1": bn_params(ks[1], num_hidden),
        "w2": conv_w(ks[2], num_hidden * 2, num_hidden, 8),
        "bn2": bn_params(ks[3], num_hidden * 2),
        "w3": conv_w(ks[4], num_hidden * 4, num_hidden * 2, 8),
        "bn3": bn_params(ks[5], num_hidden * 4),
    }


# ---------------------------------- main ------------------------------------ #

if __name__ == "__main__":
    input_channels = 4
    num_hidden = 8
    output_dimension = 16   # unused by the forward pass (matches the PyTorch module)
    kernel_size = 8
    stride = 1
    dropout = 0.35          # eval mode -> identity

    key = jax.random.PRNGKey(0)
    kp, kx = jax.random.split(key)
    params = init_params(kp, input_channels, num_hidden, kernel_size)

    # PyTorch input layout: (batch, channels, length)
    x = jax.random.normal(kx, (2, input_channels, 16), jnp.float32)

    out = feature_extractor_1dcnn(params, x, kernel_size=kernel_size, stride=stride)
    out = jax.block_until_ready(out)
    assert out.shape == (2, num_hidden * 4, 4), out.shape
    assert bool(jnp.all(jnp.isfinite(out)))

    # Verify against a pure-XLA replica of the PyTorch module (eval mode).
    ref = _reference_forward(params, x, kernel_size, stride)
    max_err = float(jnp.max(jnp.abs(out - ref)))
    assert max_err < 2e-2, f"max abs error vs reference: {max_err}"

    print("KERNEL_OK")
</pallas_src>

<mosaic_0001>
module attributes {stable_mosaic.version = 11 : i64} {
  func.func @kernel(%arg0: i32, %arg1: memref<1x16x4xf32, #tpu.memory_space<vmem>>, %arg2: memref<8x4x8xf32, #tpu.memory_space<vmem>>, %arg3: memref<1x8xf32, #tpu.memory_space<vmem>>, %arg4: memref<8x8x16xf32, #tpu.memory_space<vmem>>, %arg5: memref<1x16xf32, #tpu.memory_space<vmem>>, %arg6: memref<8x16x32xf32, #tpu.memory_space<vmem>>, %arg7: memref<1x32xf32, #tpu.memory_space<vmem>>, %arg8: memref<1x4x32xf32, #tpu.memory_space<vmem>>, %arg9: memref<24x4xf32, #tpu.memory_space<vmem>>, %arg10: memref<18x8xf32, #tpu.memory_space<vmem>>, %arg11: memref<17x8xf32, #tpu.memory_space<vmem>>, %arg12: memref<12x16xf32, #tpu.memory_space<vmem>>, %arg13: memref<14x16xf32, #tpu.memory_space<vmem>>, %arg14: memref<8x32xf32, #tpu.memory_space<vmem>>) attributes {dimension_semantics = [#tpu.dimension_semantics<parallel>], iteration_bounds = array<i64: 2>, scalar_prefetch = 0 : i64, scratch_operands = 6 : i64, tpu.core_type = #tpu.core_type<tc>, window_params = [{transform_indices = @transform_0, window_bounds = array<i64: 1, 16, 4>}, {pipeline_mode = #tpu.pipeline_mode<synchronous>, transform_indices = @transform_1, window_bounds = array<i64: 8, 4, 8>}, {pipeline_mode = #tpu.pipeline_mode<synchronous>, transform_indices = @transform_2, window_bounds = array<i64: 1, 8>}, {pipeline_mode = #tpu.pipeline_mode<synchronous>, transform_indices = @transform_3, window_bounds = array<i64: 8, 8, 16>}, {pipeline_mode = #tpu.pipeline_mode<synchronous>, transform_indices = @transform_4, window_bounds = array<i64: 1, 16>}, {pipeline_mode = #tpu.pipeline_mode<synchronous>, transform_indices = @transform_5, window_bounds = array<i64: 8, 16, 32>}, {pipeline_mode = #tpu.pipeline_mode<synchronous>, transform_indices = @transform_6, window_bounds = array<i64: 1, 32>}, {transform_indices = @transform_7, window_bounds = array<i64: 1, 4, 32>}]} {
    %cst = arith.constant 0.000000e+00 : f32
    %0 = vector.broadcast %cst : f32 to vector<24x4xf32>
    %c0 = arith.constant 0 : index
    %c0_0 = arith.constant 0 : index
    %1 = vector.load %arg9[%c0, %c0_0] : memref<24x4xf32, #tpu.memory_space<vmem>>, vector<24x4xf32>
    tpu.vector_store %arg9[%c0, %c0_0], %0 {strides = array<i32>} : memref<24x4xf32, #tpu.memory_space<vmem>>, vector<24x4xf32>,
    %c0_1 = arith.constant 0 : index
    %c0_2 = arith.constant 0 : index
    %c0_3 = arith.constant 0 : index
    %2 = vector.load %arg1[%c0_1, %c0_2, %c0_3] : memref<1x16x4xf32, #tpu.memory_space<vmem>>, vector<1x16x4xf32>
    %3 = vector.shape_cast %2 : vector<1x16x4xf32> to vector<16x4xf32>
    %c4 = arith.constant 4 : index
    %c0_4 = arith.constant 0 : index
    %4 = vector.load %arg9[%c4, %c0_4] : memref<24x4xf32, #tpu.memory_space<vmem>>, vector<16x4xf32>
    tpu.vector_store %arg9[%c4, %c0_4], %3 {strides = array<i32>} : memref<24x4xf32, #tpu.memory_space<vmem>>, vector<16x4xf32>,
    %c0_5 = arith.constant 0 : index
    %c0_6 = arith.constant 0 : index
    %5 = vector.load %arg9[%c0_5, %c0_6] : memref<24x4xf32, #tpu.memory_space<vmem>>, vector<17x4xf32>
    %c0_7 = arith.constant 0 : index
    %c0_8 = arith.constant 0 : index
    %c0_9 = arith.constant 0 : index
    %6 = vector.load %arg2[%c0_7, %c0_8, %c0_9] : memref<8x4x8xf32, #tpu.memory_space<vmem>>, vector<1x4x8xf32>
    %7 = vector.shape_cast %6 : vector<1x4x8xf32> to vector<4x8xf32>
    %cst_10 = arith.constant dense<0.000000e+00> : vector<17x8xf32>
    %8 = tpu.matmul %5, %7, %cst_10 {dimension_numbers = #tpu.dot_dimension_numbers<[1], [0], [0], [1], [0, 0, 1, 1], [], []>} : vector<17x4xf32>, vector<4x8xf32>, vector<17x8xf32> -> vector<17x8xf32>
    %c1 = arith.constant 1 : index
    %c0_11 = arith.constant 0 : index
    %9 = vector.load %arg9[%c1, %c0_11] : memref<24x4xf32, #tpu.memory_space<vmem>>, vector<17x4xf32>
    %c1_12 = arith.constant 1 : index
    %c0_13 = arith.constant 0 : index
    %c0_14 = arith.constant 0 : index
    %10 = vector.load %arg2[%c1_12, %c0_13, %c0_14] : memref<8x4x8xf32, #tpu.memory_space<vmem>>, vector<1x4x8xf32>
    %11 = vector.shape_cast %10 : vector<1x4x8xf32> to vector<4x8xf32>
    %cst_15 = arith.constant dense<0.000000e+00> : vector<17x8xf32>
    %12 = tpu.matmul %9, %11, %cst_15 {dimension_numbers = #tpu.dot_dimension_numbers<[1], [0], [0], [1], [0, 0, 1, 1], [], []>} : vector<17x4xf32>, vector<4x8xf32>, vector<17x8xf32> -> vector<17x8xf32>
    %13 = arith.addf %8, %12 : vector<17x8xf32>
    %c2 = arith.constant 2 : index
    %c0_16 = arith.constant 0 : index
    %14 = vector.load %arg9[%c2, %c0_16] : memref<24x4xf32, #tpu.memory_space<vmem>>, vector<17x4xf32>
    %c2_17 = arith.constant 2 : index
    %c0_18 = arith.constant 0 : index
    %c0_19 = arith.constant 0 : index
    %15 = vector.load %arg2[%c2_17, %c0_18, %c0_19] : memref<8x4x8xf32, #tpu.memory_space<vmem>>, vector<1x4x8xf32>
    %16 = vector.shape_cast %15 : vector<1x4x8xf32> to vector<4x8xf32>
    %cst_20 = arith.constant dense<0.000000e+00> : vector<17x8xf32>
    %17 = tpu.matmul %14, %16, %cst_20 {dimension_numbers = #tpu.dot_dimension_numbers<[1], [0], [0], [1], [0, 0, 1, 1], [], []>} : vector<17x4xf32>, vector<4x8xf32>, vector<17x8xf32> -> vector<17x8xf32>
    %18 = arith.addf %13, %17 : vector<17x8xf32>
    %c3 = arith.constant 3 : index
    %c0_21 = arith.constant 0 : index
    %19 = vector.load %arg9[%c3, %c0_21] : memref<24x4xf32, #tpu.memory_space<vmem>>, vector<17x4xf32>
    %c3_22 = arith.constant 3 : index
    %c0_23 = arith.constant 0 : index
    %c0_24 = arith.constant 0 : index
    %20 = vector.load %arg2[%c3_22, %c0_23, %c0_24] : memref<8x4x8xf32, #tpu.memory_space<vmem>>, vector<1x4x8xf32>
    %21 = vector.shape_cast %20 : vector<1x4x8xf32> to vector<4x8xf32>
    %cst_25 = arith.constant dense<0.000000e+00> : vector<17x8xf32>
    %22 = tpu.matmul %19, %21, %cst_25 {dimension_numbers = #tpu.dot_dimension_numbers<[1], [0], [0], [1], [0, 0, 1, 1], [], []>} : vector<17x4xf32>, vector<4x8xf32>, vector<17x8xf32> -> vector<17x8xf32>
    %23 = arith.addf %18, %22 : vector<17x8xf32>
    %c4_26 = arith.constant 4 : index
    %c0_27 = arith.constant 0 : index
    %24 = vector.load %arg9[%c4_26, %c0_27] : memref<24x4xf32, #tpu.memory_space<vmem>>, vector<17x4xf32>
    %c4_28 = arith.constant 4 : index
    %c0_29 = arith.constant 0 : index
    %c0_30 = arith.constant 0 : index
    %25 = vector.load %arg2[%c4_28, %c0_29, %c0_30] : memref<8x4x8xf32, #tpu.memory_space<vmem>>, vector<1x4x8xf32>
    %26 = vector.shape_cast %25 : vector<1x4x8xf32> to vector<4x8xf32>
    %cst_31 = arith.constant dense<0.000000e+00> : vector<17x8xf32>
    %27 = tpu.matmul %24, %26, %cst_31 {dimension_numbers = #tpu.dot_dimension_numbers<[1], [0], [0], [1], [0, 0, 1, 1], [], []>} : vector<17x4xf32>, vector<4x8xf32>, vector<17x8xf32> -> vector<17x8xf32>
    %28 = arith.addf %23, %27 : vector<17x8xf32>
    %c5 = arith.constant 5 : index
    %c0_32 = arith.constant 0 : index
    %29 = vector.load %arg9[%c5, %c0_32] : memref<24x4xf32, #tpu.memory_space<vmem>>, vector<17x4xf32>
    %c5_33 = arith.constant 5 : index
    %c0_34 = arith.constant 0 : index
    %c0_35 = arith.constant 0 : index
    %30 = vector.load %arg2[%c5_33, %c0_34, %c0_35] : memref<8x4x8xf32, #tpu.memory_space<vmem>>, vector<1x4x8xf32>
    %31 = vector.shape_cast %30 : vector<1x4x8xf32> to vector<4x8xf32>
    %cst_36 = arith.constant dense<0.000000e+00> : vector<17x8xf32>
    %32 = tpu.matmul %29, %31, %cst_36 {dimension_numbers = #tpu.dot_dimension_numbers<[1], [0], [0], [1], [0, 0, 1, 1], [], []>} : vector<17x4xf32>, vector<4x8xf32>, vector<17x8xf32> -> vector<17x8xf32>
    %33 = arith.addf %28, %32 : vector<17x8xf32>
    %c6 = arith.constant 6 : index
    %c0_37 = arith.constant 0 : index
    %34 = vector.load %arg9[%c6, %c0_37] : memref<24x4xf32, #tpu.memory_space<vmem>>, vector<17x4xf32>
    %c6_38 = arith.constant 6 : index
    %c0_39 = arith.constant 0 : index
    %c0_40 = arith.constant 0 : index
    %35 = vector.load %arg2[%c6_38, %c0_39, %c0_40] : memref<8x4x8xf32, #tpu.memory_space<vmem>>, vector<1x4x8xf32>
    %36 = vector.shape_cast %35 : vector<1x4x8xf32> to vector<4x8xf32>
    %cst_41 = arith.constant dense<0.000000e+00> : vector<17x8xf32>
    %37 = tpu.matmul %34, %36, %cst_41 {dimension_numbers = #tpu.dot_dimension_numbers<[1], [0], [0], [1], [0, 0, 1, 1], [], []>} : vector<17x4xf32>, vector<4x8xf32>, vector<17x8xf32> -> vector<17x8xf32>
    %38 = arith.addf %33, %37 : vector<17x8xf32>
    %c7 = arith.constant 7 : index
    %c0_42 = arith.constant 0 : index
    %39 = vector.load %arg9[%c7, %c0_42] : memref<24x4xf32, #tpu.memory_space<vmem>>, vector<17x4xf32>
    %c7_43 = arith.constant 7 : index
    %c0_44 = arith.constant 0 : index
    %c0_45 = arith.constant 0 : index
    %40 = vector.load %arg2[%c7_43, %c0_44, %c0_45] : memref<8x4x8xf32, #tpu.memory_space<vmem>>, vector<1x4x8xf32>
    %41 = vector.shape_cast %40 : vector<1x4x8xf32> to vector<4x8xf32>
    %cst_46 = arith.constant dense<0.000000e+00> : vector<17x8xf32>
    %42 = tpu.matmul %39, %41, %cst_46 {dimension_numbers = #tpu.dot_dimension_numbers<[1], [0], [0], [1], [0, 0, 1, 1], [], []>} : vector<17x4xf32>, vector<4x8xf32>, vector<17x8xf32> -> vector<17x8xf32>
    %43 = arith.addf %38, %42 : vector<17x8xf32>
    %c0_47 = arith.constant 0 : index
    %c0_48 = arith.constant 0 : index
    %44 = vector.load %arg3[%c0_47, %c0_48] : memref<1x8xf32, #tpu.memory_space<vmem>>, vector<1x8xf32>
    %45 = vector.broadcast %44 : vector<1x8xf32> to vector<17x8xf32>
    %46 = arith.addf %43, %45 : vector<17x8xf32>
    %cst_49 = arith.constant 0.000000e+00 : f32
    %47 = vector.broadcast %cst_49 : f32 to vector<17x8xf32>
    %48 = arith.maximumf %46, %47 : vector<17x8xf32>
    %cst_50 = arith.constant 0.000000e+00 : f32
    %49 = vector.broadcast %cst_50 : f32 to vector<18x8xf32>
    %c0_51 = arith.constant 0 : index
    %c0_52 = arith.constant 0 : index
    %50 = vector.load %arg10[%c0_51, %c0_52] : memref<18x8xf32, #tpu.memory_space<vmem>>, vector<18x8xf32>
    tpu.vector_store %arg10[%c0_51, %c0_52], %49 {strides = array<i32>} : memref<18x8xf32, #tpu.memory_space<vmem>>, vector<18x8xf32>,
    %c1_53 = arith.constant 1 : index
    %c0_54 = arith.constant 0 : index
    %51 = vector.load %arg10[%c1_53, %c0_54] : memref<18x8xf32, #tpu.memory_space<vmem>>, vector<17x8xf32>
    tpu.vector_store %arg10[%c1_53, %c0_54], %48 {strides = array<i32>} : memref<18x8xf32, #tpu.memory_space<vmem>>, vector<17x8xf32>,
    %c0_55 = arith.constant 0 : index
    %c0_56 = arith.constant 0 : index
    %52 = tpu.strided_load %arg10[%c0_55, %c0_56] {strides = array<i32: 2, 1>} : memref<18x8xf32, #tpu.memory_space<vmem>>, vector<9x8xf32>
    %c1_57 = arith.constant 1 : index
    %c0_58 = arith.constant 0 : index
    %53 = tpu.strided_load %arg10[%c1_57, %c0_58] {strides = array<i32: 2, 1>} : memref<18x8xf32, #tpu.memory_space<vmem>>, vector<9x8xf32>
    %54 = arith.maximumf %52, %53 : vector<9x8xf32>
    %cst_59 = arith.constant 0.000000e+00 : f32
    %55 = vector.broadcast %cst_59 : f32 to vector<17x8xf32>
    %c0_60 = arith.constant 0 : index
    %c0_61 = arith.constant 0 : index
    %56 = vector.load %arg11[%c0_60, %c0_61] : memref<17x8xf32, #tpu.memory_space<vmem>>, vector<17x8xf32>
    tpu.vector_store %arg11[%c0_60, %c0_61], %55 {strides = array<i32>} : memref<17x8xf32, #tpu.memory_space<vmem>>, vector<17x8xf32>,
    %c4_62 = arith.constant 4 : index
    %c0_63 = arith.constant 0 : index
    %57 = vector.load %arg11[%c4_62, %c0_63] : memref<17x8xf32, #tpu.memory_space<vmem>>, vector<9x8xf32>
    tpu.vector_store %arg11[%c4_62, %c0_63], %54 {strides = array<i32>} : memref<17x8xf32, #tpu.memory_space<vmem>>, vector<9x8xf32>,
    %c0_64 = arith.constant 0 : index
    %c0_65 = arith.constant 0 : index
    %58 = vector.load %arg11[%c0_64, %c0_65] : memref<17x8xf32, #tpu.memory_space<vmem>>, vector<10x8xf32>
    %c0_66 = arith.constant 0 : index
    %c0_67 = arith.constant 0 : index
    %c0_68 = arith.constant 0 : index
    %59 = vector.load %arg4[%c0_66, %c0_67, %c0_68] : memref<8x8x16xf32, #tpu.memory_space<vmem>>, vector<1x8x16xf32>
    %60 = vector.shape_cast %59 : vector<1x8x16xf32> to vector<8x16xf32>
    %cst_69 = arith.constant dense<0.000000e+00> : vector<10x16xf32>
    %61 = tpu.matmul %58, %60, %cst_69 {dimension_numbers = #tpu.dot_dimension_numbers<[1], [0], [0], [1], [0, 0, 1, 1], [], []>} : vector<10x8xf32>, vector<8x16xf32>, vector<10x16xf32> -> vector<10x16xf32>
    %c1_70 = arith.constant 1 : index
    %c0_71 = arith.constant 0 : index
    %62 = vector.load %arg11[%c1_70, %c0_71] : memref<17x8xf32, #tpu.memory_space<vmem>>, vector<10x8xf32>
    %c1_72 = arith.constant 1 : index
    %c0_73 = arith.constant 0 : index
    %c0_74 = arith.constant 0 : index
    %63 = vector.load %arg4[%c1_72, %c0_73, %c0_74] : memref<8x8x16xf32, #tpu.memory_space<vmem>>, vector<1x8x16xf32>
    %64 = vector.shape_cast %63 : vector<1x8x16xf32> to vector<8x16xf32>
    %cst_75 = arith.constant dense<0.000000e+00> : vector<10x16xf32>
    %65 = tpu.matmul %62, %64, %cst_75 {dimension_numbers = #tpu.dot_dimension_numbers<[1], [0], [0], [1], [0, 0, 1, 1], [], []>} : vector<10x8xf32>, vector<8x16xf32>, vector<10x16xf32> -> vector<10x16xf32>
    %66 = arith.addf %61, %65 : vector<10x16xf32>
    %c2_76 = arith.constant 2 : index
    %c0_77 = arith.constant 0 : index
    %67 = vector.load %arg11[%c2_76, %c0_77] : memref<17x8xf32, #tpu.memory_space<vmem>>, vector<10x8xf32>
    %c2_78 = arith.constant 2 : index
    %c0_79 = arith.constant 0 : index
    %c0_80 = arith.constant 0 : index
    %68 = vector.load %arg4[%c2_78, %c0_79, %c0_80] : memref<8x8x16xf32, #tpu.memory_space<vmem>>, vector<1x8x16xf32>
    %69 = vector.shape_cast %68 : vector<1x8x16xf32> to vector<8x16xf32>
    %cst_81 = arith.constant dense<0.000000e+00> : vector<10x16xf32>
    %70 = tpu.matmul %67, %69, %cst_81 {dimension_numbers = #tpu.dot_dimension_numbers<[1], [0], [0], [1], [0, 0, 1, 1], [], []>} : vector<10x8xf32>, vector<8x16xf32>, vector<10x16xf32> -> vector<10x16xf32>
    %71 = arith.addf %66, %70 : vector<10x16xf32>
    %c3_82 = arith.constant 3 : index
    %c0_83 = arith.constant 0 : index
    %72 = vector.load %arg11[%c3_82, %c0_83] : memref<17x8xf32, #tpu.memory_space<vmem>>, vector<10x8xf32>
    %c3_84 = arith.constant 3 : index
    %c0_85 = arith.constant 0 : index
    %c0_86 = arith.constant 0 : index
    %73 = vector.load %arg4[%c3_84, %c0_85, %c0_86] : memref<8x8x16xf32, #tpu.memory_space<vmem>>, vector<1x8x16xf32>
    %74 = vector.shape_cast %73 : vector<1x8x16xf32> to vector<8x16xf32>
    %cst_87 = arith.constant dense<0.000000e+00> : vector<10x16xf32>
    %75 = tpu.matmul %72, %74, %cst_87 {dimension_numbers = #tpu.dot_dimension_numbers<[1], [0], [0], [1], [0, 0, 1, 1], [], []>} : vector<10x8xf32>, vector<8x16xf32>, vector<10x16xf32> -> vector<10x16xf32>
    %76 = arith.addf %71, %75 : vector<10x16xf32>
    %c4_88 = arith.constant 4 : index
    %c0_89 = arith.constant 0 : index
    %77 = vector.load %arg11[%c4_88, %c0_89] : memref<17x8xf32, #tpu.memory_space<vmem>>, vector<10x8xf32>
    %c4_90 = arith.constant 4 : index
    %c0_91 = arith.constant 0 : index
    %c0_92 = arith.constant 0 : index
    %78 = vector.load %arg4[%c4_90, %c0_91, %c0_92] : memref<8x8x16xf32, #tpu.memory_space<vmem>>, vector<1x8x16xf32>
    %79 = vector.shape_cast %78 : vector<1x8x16xf32> to vector<8x16xf32>
    %cst_93 = arith.constant dense<0.000000e+00> : vector<10x16xf32>
    %80 = tpu.matmul %77, %79, %cst_93 {dimension_numbers = #tpu.dot_dimension_numbers<[1], [0], [0], [1], [0, 0, 1, 1], [], []>} : vector<10x8xf32>, vector<8x16xf32>, vector<10x16xf32> -> vector<10x16xf32>
    %81 = arith.addf %76, %80 : vector<10x16xf32>
    %c5_94 = arith.constant 5 : index
    %c0_95 = arith.constant 0 : index
    %82 = vector.load %arg11[%c5_94, %c0_95] : memref<17x8xf32, #tpu.memory_space<vmem>>, vector<10x8xf32>
    %c5_96 = arith.constant 5 : index
    %c0_97 = arith.constant 0 : index
    %c0_98 = arith.constant 0 : index
    %83 = vector.load %arg4[%c5_96, %c0_97, %c0_98] : memref<8x8x16xf32, #tpu.memory_space<vmem>>, vector<1x8x16xf32>
    %84 = vector.shape_cast %83 : vector<1x8x16xf32> to vector<8x16xf32>
    %cst_99 = arith.constant dense<0.000000e+00> : vector<10x16xf32>
    %85 = tpu.matmul %82, %84, %cst_99 {dimension_numbers = #tpu.dot_dimension_numbers<[1], [0], [0], [1], [0, 0, 1, 1], [], []>} : vector<10x8xf32>, vector<8x16xf32>, vector<10x16xf32> -> vector<10x16xf32>
    %86 = arith.addf %81, %85 : vector<10x16xf32>
    %c6_100 = arith.constant 6 : index
    %c0_101 = arith.constant 0 : index
    %87 = vector.load %arg11[%c6_100, %c0_101] : memref<17x8xf32, #tpu.memory_space<vmem>>, vector<10x8xf32>
    %c6_102 = arith.constant 6 : index
    %c0_103 = arith.constant 0 : index
    %c0_104 = arith.constant 0 : index
    %88 = vector.load %arg4[%c6_102, %c0_103, %c0_104] : memref<8x8x16xf32, #tpu.memory_space<vmem>>, vector<1x8x16xf32>
    %89 = vector.shape_cast %88 : vector<1x8x16xf32> to vector<8x16xf32>
    %cst_105 = arith.constant dense<0.000000e+00> : vector<10x16xf32>
    %90 = tpu.matmul %87, %89, %cst_105 {dimension_numbers = #tpu.dot_dimension_numbers<[1], [0], [0], [1], [0, 0, 1, 1], [], []>} : vector<10x8xf32>, vector<8x16xf32>, vector<10x16xf32> -> vector<10x16xf32>
    %91 = arith.addf %86, %90 : vector<10x16xf32>
    %c7_106 = arith.constant 7 : index
    %c0_107 = arith.constant 0 : index
    %92 = vector.load %arg11[%c7_106, %c0_107] : memref<17x8xf32, #tpu.memory_space<vmem>>, vector<10x8xf32>
    %c7_108 = arith.constant 7 : index
    %c0_109 = arith.constant 0 : index
    %c0_110 = arith.constant 0 : index
    %93 = vector.load %arg4[%c7_108, %c0_109, %c0_110] : memref<8x8x16xf32, #tpu.memory_space<vmem>>, vector<1x8x16xf32>
    %94 = vector.shape_cast %93 : vector<1x8x16xf32> to vector<8x16xf32>
    %cst_111 = arith.constant dense<0.000000e+00> : vector<10x16xf32>
    %95 = tpu.matmul %92, %94, %cst_111 {dimension_numbers = #tpu.dot_dimension_numbers<[1], [0], [0], [1], [0, 0, 1, 1], [], []>} : vector<10x8xf32>, vector<8x16xf32>, vector<10x16xf32> -> vector<10x16xf32>
    %96 = arith.addf %91, %95 : vector<10x16xf32>
    %c0_112 = arith.constant 0 : index
    %c0_113 = arith.constant 0 : index
    %97 = vector.load %arg5[%c0_112, %c0_113] : memref<1x16xf32, #tpu.memory_space<vmem>>, vector<1x16xf32>
    %98 = vector.broadcast %97 : vector<1x16xf32> to vector<10x16xf32>
    %99 = arith.addf %96, %98 : vector<10x16xf32>
    %cst_114 = arith.constant 0.000000e+00 : f32
    %100 = vector.broadcast %cst_114 : f32 to vector<10x16xf32>
    %101 = arith.maximumf %99, %100 : vector<10x16xf32>
    %cst_115 = arith.constant 0.000000e+00 : f32
    %102 = vector.broadcast %cst_115 : f32 to vector<12x16xf32>
    %c0_116 = arith.constant 0 : index
    %c0_117 = arith.constant 0 : index
    %103 = vector.load %arg12[%c0_116, %c0_117] : memref<12x16xf32, #tpu.memory_space<vmem>>, vector<12x16xf32>
    tpu.vector_store %arg12[%c0_116, %c0_117], %102 {strides = array<i32>} : memref<12x16xf32, #tpu.memory_space<vmem>>, vector<12x16xf32>,
    %c1_118 = arith.constant 1 : index
    %c0_119 = arith.constant 0 : index
    %104 = vector.load %arg12[%c1_118, %c0_119] : memref<12x16xf32, #tpu.memory_space<vmem>>, vector<10x16xf32>
    tpu.vector_store %arg12[%c1_118, %c0_119], %101 {strides = array<i32>} : memref<12x16xf32, #tpu.memory_space<vmem>>, vector<10x16xf32>,
    %c0_120 = arith.constant 0 : index
    %c0_121 = arith.constant 0 : index
    %105 = tpu.strided_load %arg12[%c0_120, %c0_121] {strides = array<i32: 2, 1>} : memref<12x16xf32, #tpu.memory_space<vmem>>, vector<6x16xf32>
    %c1_122 = arith.constant 1 : index
    %c0_123 = arith.constant 0 : index
    %106 = tpu.strided_load %arg12[%c1_122, %c0_123] {strides = array<i32: 2, 1>} : memref<12x16xf32, #tpu.memory_space<vmem>>, vector<6x16xf32>
    %107 = arith.maximumf %105, %106 : vector<6x16xf32>
    %cst_124 = arith.constant 0.000000e+00 : f32
    %108 = vector.broadcast %cst_124 : f32 to vector<14x16xf32>
    %c0_125 = arith.constant 0 : index
    %c0_126 = arith.constant 0 : index
    %109 = vector.load %arg13[%c0_125, %c0_126] : memref<14x16xf32, #tpu.memory_space<vmem>>, vector<14x16xf32>
    tpu.vector_store %arg13[%c0_125, %c0_126], %108 {strides = array<i32>} : memref<14x16xf32, #tpu.memory_space<vmem>>, vector<14x16xf32>,
    %c4_127 = arith.constant 4 : index
    %c0_128 = arith.constant 0 : index
    %110 = vector.load %arg13[%c4_127, %c0_128] : memref<14x16xf32, #tpu.memory_space<vmem>>, vector<6x16xf32>
    tpu.vector_store %arg13[%c4_127, %c0_128], %107 {strides = array<i32>} : memref<14x16xf32, #tpu.memory_space<vmem>>, vector<6x16xf32>,
    %c0_129 = arith.constant 0 : index
    %c0_130 = arith.constant 0 : index
    %111 = vector.load %arg13[%c0_129, %c0_130] : memref<14x16xf32, #tpu.memory_space<vmem>>, vector<7x16xf32>
    %c0_131 = arith.constant 0 : index
    %c0_132 = arith.constant 0 : index
    %c0_133 = arith.constant 0 : index
    %112 = vector.load %arg6[%c0_131, %c0_132, %c0_133] : memref<8x16x32xf32, #tpu.memory_space<vmem>>, vector<1x16x32xf32>
    %113 = vector.shape_cast %112 : vector<1x16x32xf32> to vector<16x32xf32>
    %cst_134 = arith.constant dense<0.000000e+00> : vector<7x32xf32>
    %114 = tpu.matmul %111, %113, %cst_134 {dimension_numbers = #tpu.dot_dimension_numbers<[1], [0], [0], [1], [0, 0, 1, 1], [], []>} : vector<7x16xf32>, vector<16x32xf32>, vector<7x32xf32> -> vector<7x32xf32>
    %c1_135 = arith.constant 1 : index
    %c0_136 = arith.constant 0 : index
    %115 = vector.load %arg13[%c1_135, %c0_136] : memref<14x16xf32, #tpu.memory_space<vmem>>, vector<7x16xf32>
    %c1_137 = arith.constant 1 : index
    %c0_138 = arith.constant 0 : index
    %c0_139 = arith.constant 0 : index
    %116 = vector.load %arg6[%c1_137, %c0_138, %c0_139] : memref<8x16x32xf32, #tpu.memory_space<vmem>>, vector<1x16x32xf32>
    %117 = vector.shape_cast %116 : vector<1x16x32xf32> to vector<16x32xf32>
    %cst_140 = arith.constant dense<0.000000e+00> : vector<7x32xf32>
    %118 = tpu.matmul %115, %117, %cst_140 {dimension_numbers = #tpu.dot_dimension_numbers<[1], [0], [0], [1], [0, 0, 1, 1], [], []>} : vector<7x16xf32>, vector<16x32xf32>, vector<7x32xf32> -> vector<7x32xf32>
    %119 = arith.addf %114, %118 : vector<7x32xf32>
    %c2_141 = arith.constant 2 : index
    %c0_142 = arith.constant 0 : index
    %120 = vector.load %arg13[%c2_141, %c0_142] : memref<14x16xf32, #tpu.memory_space<vmem>>, vector<7x16xf32>
    %c2_143 = arith.constant 2 : index
    %c0_144 = arith.constant 0 : index
    %c0_145 = arith.constant 0 : index
    %121 = vector.load %arg6[%c2_143, %c0_144, %c0_145] : memref<8x16x32xf32, #tpu.memory_space<vmem>>, vector<1x16x32xf32>
    %122 = vector.shape_cast %121 : vector<1x16x32xf32> to vector<16x32xf32>
    %cst_146 = arith.constant dense<0.000000e+00> : vector<7x32xf32>
    %123 = tpu.matmul %120, %122, %cst_146 {dimension_numbers = #tpu.dot_dimension_numbers<[1], [0], [0], [1], [0, 0, 1, 1], [], []>} : vector<7x16xf32>, vector<16x32xf32>, vector<7x32xf32> -> vector<7x32xf32>
    %124 = arith.addf %119, %123 : vector<7x32xf32>
    %c3_147 = arith.constant 3 : index
    %c0_148 = arith.constant 0 : index
    %125 = vector.load %arg13[%c3_147, %c0_148] : memref<14x16xf32, #tpu.memory_space<vmem>>, vector<7x16xf32>
    %c3_149 = arith.constant 3 : index
    %c0_150 = arith.constant 0 : index
    %c0_151 = arith.constant 0 : index
    %126 = vector.load %arg6[%c3_149, %c0_150, %c0_151] : memref<8x16x32xf32, #tpu.memory_space<vmem>>, vector<1x16x32xf32>
    %127 = vector.shape_cast %126 : vector<1x16x32xf32> to vector<16x32xf32>
    %cst_152 = arith.constant dense<0.000000e+00> : vector<7x32xf32>
    %128 = tpu.matmul %125, %127, %cst_152 {dimension_numbers = #tpu.dot_dimension_numbers<[1], [0], [0], [1], [0, 0, 1, 1], [], []>} : vector<7x16xf32>, vector<16x32xf32>, vector<7x32xf32> -> vector<7x32xf32>
    %129 = arith.addf %124, %128 : vector<7x32xf32>
    %c4_153 = arith.constant 4 : index
    %c0_154 = arith.constant 0 : index
    %130 = vector.load %arg13[%c4_153, %c0_154] : memref<14x16xf32, #tpu.memory_space<vmem>>, vector<7x16xf32>
    %c4_155 = arith.constant 4 : index
    %c0_156 = arith.constant 0 : index
    %c0_157 = arith.constant 0 : index
    %131 = vector.load %arg6[%c4_155, %c0_156, %c0_157] : memref<8x16x32xf32, #tpu.memory_space<vmem>>, vector<1x16x32xf32>
    %132 = vector.shape_cast %131 : vector<1x16x32xf32> to vector<16x32xf32>
    %cst_158 = arith.constant dense<0.000000e+00> : vector<7x32xf32>
    %133 = tpu.matmul %130, %132, %cst_158 {dimension_numbers = #tpu.dot_dimension_numbers<[1], [0], [0], [1], [0, 0, 1, 1], [], []>} : vector<7x16xf32>, vector<16x32xf32>, vector<7x32xf32> -> vector<7x32xf32>
    %134 = arith.addf %129, %133 : vector<7x32xf32>
    %c5_159 = arith.constant 5 : index
    %c0_160 = arith.constant 0 : index
    %135 = vector.load %arg13[%c5_159, %c0_160] : memref<14x16xf32, #tpu.memory_space<vmem>>, vector<7x16xf32>
    %c5_161 = arith.constant 5 : index
    %c0_162 = arith.constant 0 : index
    %c0_163 = arith.constant 0 : index
    %136 = vector.load %arg6[%c5_161, %c0_162, %c0_163] : memref<8x16x32xf32, #tpu.memory_space<vmem>>, vector<1x16x32xf32>
    %137 = vector.shape_cast %136 : vector<1x16x32xf32> to vector<16x32xf32>
    %cst_164 = arith.constant dense<0.000000e+00> : vector<7x32xf32>
    %138 = tpu.matmul %135, %137, %cst_164 {dimension_numbers = #tpu.dot_dimension_numbers<[1], [0], [0], [1], [0, 0, 1, 1], [], []>} : vector<7x16xf32>, vector<16x32xf32>, vector<7x32xf32> -> vector<7x32xf32>
    %139 = arith.addf %134, %138 : vector<7x32xf32>
    %c6_165 = arith.constant 6 : index
    %c0_166 = arith.constant 0 : index
    %140 = vector.load %arg13[%c6_165, %c0_166] : memref<14x16xf32, #tpu.memory_space<vmem>>, vector<7x16xf32>
    %c6_167 = arith.constant 6 : index
    %c0_168 = arith.constant 0 : index
    %c0_169 = arith.constant 0 : index
    %141 = vector.load %arg6[%c6_167, %c0_168, %c0_169] : memref<8x16x32xf32, #tpu.memory_space<vmem>>, vector<1x16x32xf32>
    %142 = vector.shape_cast %141 : vector<1x16x32xf32> to vector<16x32xf32>
    %cst_170 = arith.constant dense<0.000000e+00> : vector<7x32xf32>
    %143 = tpu.matmul %140, %142, %cst_170 {dimension_numbers = #tpu.dot_dimension_numbers<[1], [0], [0], [1], [0, 0, 1, 1], [], []>} : vector<7x16xf32>, vector<16x32xf32>, vector<7x32xf32> -> vector<7x32xf32>
    %144 = arith.addf %139, %143 : vector<7x32xf32>
    %c7_171 = arith.constant 7 : index
    %c0_172 = arith.constant 0 : index
    %145 = vector.load %arg13[%c7_171, %c0_172] : memref<14x16xf32, #tpu.memory_space<vmem>>, vector<7x16xf32>
    %c7_173 = arith.constant 7 : index
    %c0_174 = arith.constant 0 : index
    %c0_175 = arith.constant 0 : index
    %146 = vector.load %arg6[%c7_173, %c0_174, %c0_175] : memref<8x16x32xf32, #tpu.memory_space<vmem>>, vector<1x16x32xf32>
    %147 = vector.shape_cast %146 : vector<1x16x32xf32> to vector<16x32xf32>
    %cst_176 = arith.constant dense<0.000000e+00> : vector<7x32xf32>
    %148 = tpu.matmul %145, %147, %cst_176 {dimension_numbers = #tpu.dot_dimension_numbers<[1], [0], [0], [1], [0, 0, 1, 1], [], []>} : vector<7x16xf32>, vector<16x32xf32>, vector<7x32xf32> -> vector<7x32xf32>
    %149 = arith.addf %144, %148 : vector<7x32xf32>
    %c0_177 = arith.constant 0 : index
    %c0_178 = arith.constant 0 : index
    %150 = vector.load %arg7[%c0_177, %c0_178] : memref<1x32xf32, #tpu.memory_space<vmem>>, vector<1x32xf32>
    %151 = vector.broadcast %150 : vector<1x32xf32> to vector<7x32xf32>
    %152 = arith.addf %149, %151 : vector<7x32xf32>
    %cst_179 = arith.constant 0.000000e+00 : f32
    %153 = vector.broadcast %cst_179 : f32 to vector<7x32xf32>
    %154 = arith.maximumf %152, %153 : vector<7x32xf32>
    %cst_180 = arith.constant 0.000000e+00 : f32
    %155 = vector.broadcast %cst_180 : f32 to vector<8x32xf32>
    %c0_181 = arith.constant 0 : index
    %c0_182 = arith.constant 0 : index
    %156 = vector.load %arg14[%c0_181, %c0_182] : memref<8x32xf32, #tpu.memory_space<vmem>>, vector<8x32xf32>
    tpu.vector_store %arg14[%c0_181, %c0_182], %155 {strides = array<i32>} : memref<8x32xf32, #tpu.memory_space<vmem>>, vector<8x32xf32>,
    %c1_183 = arith.constant 1 : index
    %c0_184 = arith.constant 0 : index
    %157 = vector.load %arg14[%c1_183, %c0_184] : memref<8x32xf32, #tpu.memory_space<vmem>>, vector<7x32xf32>
    tpu.vector_store %arg14[%c1_183, %c0_184], %154 {strides = array<i32>} : memref<8x32xf32, #tpu.memory_space<vmem>>, vector<7x32xf32>,
    %c0_185 = arith.constant 0 : index
    %c0_186 = arith.constant 0 : index
    %158 = tpu.strided_load %arg14[%c0_185, %c0_186] {strides = array<i32: 2, 1>} : memref<8x32xf32, #tpu.memory_space<vmem>>, vector<4x32xf32>
    %c1_187 = arith.constant 1 : index
    %c0_188 = arith.constant 0 : index
    %159 = tpu.strided_load %arg14[%c1_187, %c0_188] {strides = array<i32: 2, 1>} : memref<8x32xf32, #tpu.memory_space<vmem>>, vector<4x32xf32>
    %160 = arith.maximumf %158, %159 : vector<4x32xf32>
    %c0_189 = arith.constant 0 : index
    %c0_190 = arith.constant 0 : index
    %c0_191 = arith.constant 0 : index
    %161 = vector.load %arg8[%c0_189, %c0_190, %c0_191] : memref<1x4x32xf32, #tpu.memory_space<vmem>>, vector<1x4x32xf32>
    %162 = vector.shape_cast %161 : vector<1x4x32xf32> to vector<4x32xf32>
    %163 = vector.shape_cast %160 : vector<4x32xf32> to vector<1x4x32xf32>
    tpu.vector_store %arg8[%c0_189, %c0_190, %c0_191], %163 {strides = array<i32>} : memref<1x4x32xf32, #tpu.memory_space<vmem>>, vector<1x4x32xf32>,
    return
  }
  func.func @transform_0(%arg0: i32) -> (i32, i32, i32) {
    %c0_i32 = arith.constant 0 : i32
    %c0_i32_0 = arith.constant 0 : i32
    %c0_i32_1 = arith.constant 0 : i32
    return %arg0, %c0_i32, %c0_i32_0 : i32, i32, i32
  }
  func.func @transform_1(%arg0: i32) -> (i32, i32, i32) {
    %c0_i32 = arith.constant 0 : i32
    %c0_i32_0 = arith.constant 0 : i32
    %c0_i32_1 = arith.constant 0 : i32
    %c0_i32_2 = arith.constant 0 : i32
    return %c0_i32, %c0_i32_0, %c0_i32_1 : i32, i32, i32
  }
  func.func @transform_2(%arg0: i32) -> (i32, i32) {
    %c0_i32 = arith.constant 0 : i32
    %c0_i32_0 = arith.constant 0 : i32
    %c0_i32_1 = arith.constant 0 : i32
    return %c0_i32, %c0_i32_0 : i32, i32
  }
  func.func @transform_3(%arg0: i32) -> (i32, i32, i32) {
    %c0_i32 = arith.constant 0 : i32
    %c0_i32_0 = arith.constant 0 : i32
    %c0_i32_1 = arith.constant 0 : i32
    %c0_i32_2 = arith.constant 0 : i32
    return %c0_i32, %c0_i32_0, %c0_i32_1 : i32, i32, i32
  }
  func.func @transform_4(%arg0: i32) -> (i32, i32) {
    %c0_i32 = arith.constant 0 : i32
    %c0_i32_0 = arith.constant 0 : i32
    %c0_i32_1 = arith.constant 0 : i32
    return %c0_i32, %c0_i32_0 : i32, i32
  }
  func.func @transform_5(%arg0: i32) -> (i32, i32, i32) {
    %c0_i32 = arith.constant 0 : i32
    %c0_i32_0 = arith.constant 0 : i32
    %c0_i32_1 = arith.constant 0 : i32
    %c0_i32_2 = arith.constant 0 : i32
    return %c0_i32, %c0_i32_0, %c0_i32_1 : i32, i32, i32
  }
  func.func @transform_6(%arg0: i32) -> (i32, i32) {
    %c0_i32 = arith.constant 0 : i32
    %c0_i32_0 = arith.constant 0 : i32
    %c0_i32_1 = arith.constant 0 : i32
    return %c0_i32, %c0_i32_0 : i32, i32
  }
  func.func @transform_7(%arg0: i32) -> (i32, i32, i32) {
    %c0_i32 = arith.constant 0 : i32
    %c0_i32_0 = arith.constant 0 : i32
    %c0_i32_1 = arith.constant 0 : i32
    return %arg0, %c0_i32, %c0_i32_0 : i32, i32, i32
  }
}

</mosaic_0001>

<llo_original>
// kernel: feature_extractor_1dcnn.1
$region0: #{feature_extractor_1dcnn.1}
  #allocation0 [shape = 'u32[]', space=smem, size = 0x4, offset = 0x4, fixed_abs, tag = 'smem constant byte address 0x4 - core index']
  #allocation1 [shape = 'u32[72,128]{1,0:T(1,128)}', space=vmem, size = 0x9000, scoped, tag = 'internal scratch']
  #allocation2 [shape = 'f32[24,4]{1,0:T(8,128)}', space=vmem, size = 0x3000, scoped, tag = 'scratch operand']
  #allocation3 [shape = 'f32[18,8]{1,0:T(8,128)}', space=vmem, size = 0x3000, scoped, tag = 'scratch operand']
  #allocation4 [shape = 'f32[17,8]{1,0:T(8,128)}', space=vmem, size = 0x3000, scoped, tag = 'scratch operand']
  #allocation5 [shape = 'f32[12,16]{1,0:T(8,128)}', space=vmem, size = 0x2000, scoped, tag = 'scratch operand']
  #allocation6 [shape = 'f32[14,16]{1,0:T(8,128)}', space=vmem, size = 0x2000, scoped, tag = 'scratch operand']
  #allocation7 [shape = 'f32[8,32]{1,0:T(8,128)}', space=vmem, size = 0x1000, scoped, tag = 'scratch operand']
  %s0 = inlined_call_operand.vmem [shape: f32[2,16,4], index: 0, kind: input, shape index: {}]
  %s1 = inlined_call_operand.vmem [shape: f32[8,4,8], index: 1, kind: input, shape index: {}]
  %s2 = inlined_call_operand.vmem [shape: f32[1,8], index: 2, kind: input, shape index: {}]
  %s3 = inlined_call_operand.vmem [shape: f32[8,8,16], index: 3, kind: input, shape index: {}]
  %s4 = inlined_call_operand.vmem [shape: f32[1,16], index: 4, kind: input, shape index: {}]
  %s5 = inlined_call_operand.vmem [shape: f32[8,16,32], index: 5, kind: input, shape index: {}]
  %s6 = inlined_call_operand.vmem [shape: f32[1,32], index: 6, kind: input, shape index: {}]
  %s7 = inlined_call_operand.hbm [shape: f32[2,4,32], index: 7, kind: output, shape index: {}]
  %s8 = sld [smem:[#allocation0]]
  $region61: #{feature_extractor_1dcnn.1} parent=0
    _
  %s10 = ssub.s32 1, %s8
  %s11 = scalar_select 0, %s10, %s8
  $region1: #{feature_extractor_1dcnn.1} parent=0
    #allocation8 [shape = 'u8[4096]{0}', space=vmem, size = 0x1000, scoped, tag = 'output window, operand 0']
    #allocation9 [shape = 's32[2]{0}', space=sflag, size = 0x8, scoped, tag = 'scoped memory for feature_extractor_1dcnn.1']
    %12 = vsyncpa [#allocation9], 0
    %s13 = scalar_lea.sflag [#allocation9], 1
    %14 = vsyncpa %s13, 0
    loop: start=0, step=1, limit=4
    $region2: #{feature_extractor_1dcnn.1} parent=1 // loop_pre_header
      _
    $region3: #{feature_extractor_1dcnn.1} parent=1 // loop_header
      %s16 = sphi 0, %s20
      %p17 = scmp.ge.s32.totalorder %s16, 4
      %s26 = sphi 0, %s28
      %s29 = sphi 0, %s26
      %s30 = sphi 0, %s29
      %s46 = sphi 0, %s30
      %s50 = sphi 0, %s50
      %s52 = sphi 0, %s50
      %s53 = sphi 0, %s52
      %s67 = sphi 0, %s53
      %s71 = sphi 0, %s71
      %s73 = sphi 0, %s71
      %s74 = sphi 0, %s73
      %s88 = sphi 0, %s74
      %s92 = sphi 0, %s92
      %s94 = sphi 0, %s92
      %s95 = sphi 0, %s94
      %s109 = sphi 0, %s95
      %s113 = sphi 0, %s113
      %s115 = sphi 0, %s113
      %s116 = sphi 0, %s115
      %s130 = sphi 0, %s116
      %s134 = sphi 0, %s134
      %s136 = sphi 0, %s134
      %s137 = sphi 0, %s136
      %s151 = sphi 0, %s137
      %s155 = sphi 0, %s155
      %s157 = sphi 0, %s155
      %s158 = sphi 0, %s157
      %s172 = sphi 0, %s158
      %s178 = sphi 0, %s180
      %s181 = sphi 0, %s178
      %s182 = sphi 0, %s181
      %s198 = sphi 0, %s182
    $region4: #{feature_extractor_1dcnn.1} parent=1 // loop_header_branch
      %19 = sbr.rel (%p17) target = $region8
    $region5: #{feature_extractor_1dcnn.1} parent=1 // loop_body
      %s21 = ssub.s32 %s16, 1
      %s22 = ssub.s32 %s16, 2
      %s23 = sadd.s32 %s16, 1
      %s24 = ssub.s32 %s16, %s23
      %p25 = scmp.eq.s32.totalorder %s24, 0
      %s27 = sadd.s32 %s26, 1
      %s28 = scalar_select %p25, %s26, %s27
      %p31 = pneg %p25
      %p32 = scmp.eq.s32.totalorder %s16, 1
      %p33 = por %p31, %p32
      %p34 = scmp.ne.s32.totalorder %s26, %s29
      %p35 = scmp.eq.s32.totalorder %s16, 0
      %p36 = por %p34, %p35
      %p37 = scmp.ne.s32.totalorder %s26, %s29
      %p38 = scmp.eq.s32.totalorder %s21, 1
      %p39 = por %p37, %p38
      %p40 = scmp.ne.s32.totalorder %s29, %s30
      %p41 = scmp.eq.s32.totalorder %s21, 0
      %p42 = por %p40, %p41
      %p43 = scmp.ne.s32.totalorder %s29, %s30
      %p44 = scmp.eq.s32.totalorder %s22, 1
      %p45 = por %p43, %p44
      %p47 = scmp.ne.s32.totalorder %s30, %s46
      %p48 = scmp.eq.s32.totalorder %s22, 0
      %p49 = por %p47, %p48
      %s51 = sadd.s32 %s50, 1
      %p54 = scmp.eq.s32.totalorder %s16, 1
      %p55 = scmp.ne.s32.totalorder %s50, %s52
      %p56 = scmp.eq.s32.totalorder %s16, 0
      %p57 = por %p55, %p56
      %p58 = scmp.ne.s32.totalorder %s50, %s52
      %p59 = scmp.eq.s32.totalorder %s21, 1
      %p60 = por %p58, %p59
      %p61 = scmp.ne.s32.totalorder %s52, %s53
      %p62 = scmp.eq.s32.totalorder %s21, 0
      %p63 = por %p61, %p62
      %p64 = scmp.ne.s32.totalorder %s52, %s53
      %p65 = scmp.eq.s32.totalorder %s22, 1
      %p66 = por %p64, %p65
      %p68 = scmp.ne.s32.totalorder %s53, %s67
      %p69 = scmp.eq.s32.totalorder %s22, 0
      %p70 = por %p68, %p69
      %s72 = sadd.s32 %s71, 1
      %p75 = scmp.eq.s32.totalorder %s16, 1
      %p76 = scmp.ne.s32.totalorder %s71, %s73
      %p77 = scmp.eq.s32.totalorder %s16, 0
      %p78 = por %p76, %p77
      %p79 = scmp.ne.s32.totalorder %s71, %s73
      %p80 = scmp.eq.s32.totalorder %s21, 1
      %p81 = por %p79, %p80
      %p82 = scmp.ne.s32.totalorder %s73, %s74
      %p83 = scmp.eq.s32.totalorder %s21, 0
      %p84 = por %p82, %p83
      %p85 = scmp.ne.s32.totalorder %s73, %s74
      %p86 = scmp.eq.s32.totalorder %s22, 1
      %p87 = por %p85, %p86
      %p89 = scmp.ne.s32.totalorder %s74, %s88
      %p90 = scmp.eq.s32.totalorder %s22, 0
      %p91 = por %p89, %p90
      %s93 = sadd.s32 %s92, 1
      %p96 = scmp.eq.s32.totalorder %s16, 1
      %p97 = scmp.ne.s32.totalorder %s92, %s94
      %p98 = scmp.eq.s32.totalorder %s16, 0
      %p99 = por %p97, %p98
      %p100 = scmp.ne.s32.totalorder %s92, %s94
      %p101 = scmp.eq.s32.totalorder %s21, 1
      %p102 = por %p100, %p101
      %p103 = scmp.ne.s32.totalorder %s94, %s95
      %p104 = scmp.eq.s32.totalorder %s21, 0
      %p105 = por %p103, %p104
      %p106 = scmp.ne.s32.totalorder %s94, %s95
      %p107 = scmp.eq.s32.totalorder %s22, 1
      %p108 = por %p106, %p107
      %p110 = scmp.ne.s32.totalorder %s95, %s109
      %p111 = scmp.eq.s32.totalorder %s22, 0
      %p112 = por %p110, %p111
      %s114 = sadd.s32 %s113, 1
      %p117 = scmp.eq.s32.totalorder %s16, 1
      %p118 = scmp.ne.s32.totalorder %s113, %s115
      %p119 = scmp.eq.s32.totalorder %s16, 0
      %p120 = por %p118, %p119
      %p121 = scmp.ne.s32.totalorder %s113, %s115
      %p122 = scmp.eq.s32.totalorder %s21, 1
      %p123 = por %p121, %p122
      %p124 = scmp.ne.s32.totalorder %s115, %s116
      %p125 = scmp.eq.s32.totalorder %s21, 0
      %p126 = por %p124, %p125
      %p127 = scmp.ne.s32.totalorder %s115, %s116
      %p128 = scmp.eq.s32.totalorder %s22, 1
      %p129 = por %p127, %p128
      %p131 = scmp.ne.s32.totalorder %s116, %s130
      %p132 = scmp.eq.s32.totalorder %s22, 0
      %p133 = por %p131, %p132
      %s135 = sadd.s32 %s134, 1
      %p138 = scmp.eq.s32.totalorder %s16, 1
      %p139 = scmp.ne.s32.totalorder %s134, %s136
      %p140 = scmp.eq.s32.totalorder %s16, 0
      %p141 = por %p139, %p140
      %p142 = scmp.ne.s32.totalorder %s134, %s136
      %p143 = scmp.eq.s32.totalorder %s21, 1
      %p144 = por %p142, %p143
      %p145 = scmp.ne.s32.totalorder %s136, %s137
      %p146 = scmp.eq.s32.totalorder %s21, 0
      %p147 = por %p145, %p146
      %p148 = scmp.ne.s32.totalorder %s136, %s137
      %p149 = scmp.eq.s32.totalorder %s22, 1
      %p150 = por %p148, %p149
      %p152 = scmp.ne.s32.totalorder %s137, %s151
      %p153 = scmp.eq.s32.totalorder %s22, 0
      %p154 = por %p152, %p153
      %s156 = sadd.s32 %s155, 1
      %p159 = scmp.eq.s32.totalorder %s16, 1
      %p160 = scmp.ne.s32.totalorder %s155, %s157
      %p161 = scmp.eq.s32.totalorder %s16, 0
      %p162 = por %p160, %p161
      %p163 = scmp.ne.s32.totalorder %s155, %s157
      %p164 = scmp.eq.s32.totalorder %s21, 1
      %p165 = por %p163, %p164
      %p166 = scmp.ne.s32.totalorder %s157, %s158
      %p167 = scmp.eq.s32.totalorder %s21, 0
      %p168 = por %p166, %p167
      %p169 = scmp.ne.s32.totalorder %s157, %s158
      %p170 = scmp.eq.s32.totalorder %s22, 1
      %p171 = por %p169, %p170
      %p173 = scmp.ne.s32.totalorder %s158, %s172
      %p174 = scmp.eq.s32.totalorder %s22, 0
      %p175 = por %p173, %p174
      %s176 = ssub.s32 %s16, %s23
      %p177 = scmp.eq.s32.totalorder %s176, 0
      %s179 = sadd.s32 %s178, 1
      %s180 = scalar_select %p177, %s178, %s179
      %p183 = pneg %p177
      %p184 = scmp.eq.s32.totalorder %s16, 1
      %p185 = por %p183, %p184
      %p186 = scmp.ne.s32.totalorder %s178, %s181
      %p187 = scmp.eq.s32.totalorder %s16, 0
      %p188 = por %p186, %p187
      %p189 = scmp.ne.s32.totalorder %s178, %s181
      %p190 = scmp.eq.s32.totalorder %s21, 1
      %p191 = por %p189, %p190
      %p192 = scmp.ne.s32.totalorder %s181, %s182
      %p193 = scmp.eq.s32.totalorder %s21, 0
      %p194 = por %p192, %p193
      %p195 = scmp.ne.s32.totalorder %s181, %s182
      %p196 = scmp.eq.s32.totalorder %s22, 1
      %p197 = por %p195, %p196
      %p199 = scmp.ne.s32.totalorder %s182, %s198
      %p200 = scmp.eq.s32.totalorder %s22, 0
      %p201 = por %p199, %p200
      %p202 = scmp.le.s32.totalorder 1, %s16
      %p203 = scmp.lt.s32.totalorder %s16, 3
      %p204 = pnand %p202, %p203
      %p205 = pneg %p204
      // Predicated region
      $region9: #{feature_extractor_1dcnn.1} parent=5 // pred_check
        _
      $region10: #{feature_extractor_1dcnn.1} parent=5 // pred_check_branch
        %207 = sbr.rel (%p204) target = $region12
      $region11: #{feature_extractor_1dcnn.1} parent=5 // pred_region
        %s208 = ssub.s32 %s16, 1
        // Predicated region
        $region13: #{feature_extractor_1dcnn.1} parent=11 // pred_check
          %p209 = pneg %p63
        $region14: #{feature_extractor_1dcnn.1} parent=11 // pred_check_branch
          %211 = sbr.rel (%p209) target = $region16
        $region15: #{feature_extractor_1dcnn.1} parent=11 // pred_region
          _
        $region16: #{feature_extractor_1dcnn.1} parent=11 // pred_fallthru
          _
        // Predicated region
        $region17: #{feature_extractor_1dcnn.1} parent=11 // pred_check
          %p212 = pneg %p84
        $region18: #{feature_extractor_1dcnn.1} parent=11 // pred_check_branch
          %214 = sbr.rel (%p212) target = $region20
        $region19: #{feature_extractor_1dcnn.1} parent=11 // pred_region
          _
        $region20: #{feature_extractor_1dcnn.1} parent=11 // pred_fallthru
          _
        // Predicated region
        $region21: #{feature_extractor_1dcnn.1} parent=11 // pred_check
          %p215 = pneg %p105
        $region22: #{feature_extractor_1dcnn.1} parent=11 // pred_check_branch
          %217 = sbr.rel (%p215) target = $region24
        $region23: #{feature_extractor_1dcnn.1} parent=11 // pred_region
          _
        $region24: #{feature_extractor_1dcnn.1} parent=11 // pred_fallthru
          _
        // Predicated region
        $region25: #{feature_extractor_1dcnn.1} parent=11 // pred_check
          %p218 = pneg %p126
        $region26: #{feature_extractor_1dcnn.1} parent=11 // pred_check_branch
          %220 = sbr.rel (%p218) target = $region28
        $region27: #{feature_extractor_1dcnn.1} parent=11 // pred_region
          _
        $region28: #{feature_extractor_1dcnn.1} parent=11 // pred_fallthru
          _
        // Predicated region
        $region29: #{feature_extractor_1dcnn.1} parent=11 // pred_check
          %p221 = pneg %p147
        $region30: #{feature_extractor_1dcnn.1} parent=11 // pred_check_branch
          %223 = sbr.rel (%p221) target = $region32
        $region31: #{feature_extractor_1dcnn.1} parent=11 // pred_region
          _
        $region32: #{feature_extractor_1dcnn.1} parent=11 // pred_fallthru
          _
        // Predicated region
        $region33: #{feature_extractor_1dcnn.1} parent=11 // pred_check
          %p224 = pneg %p168
        $region34: #{feature_extractor_1dcnn.1} parent=11 // pred_check_branch
          %226 = sbr.rel (%p224) target = $region36
        $region35: #{feature_extractor_1dcnn.1} parent=11 // pred_region
          _
        $region36: #{feature_extractor_1dcnn.1} parent=11 // pred_fallthru
          _
      $region12: #{feature_extractor_1dcnn.1} parent=5 // pred_fallthru
        _
      %p227 = scmp.lt.s32.totalorder %s16, 2
      // Predicated region
      $region37: #{feature_extractor_1dcnn.1} parent=5 // pred_check
        %p228 = pneg %p227
      $region38: #{feature_extractor_1dcnn.1} parent=5 // pred_check_branch
        %230 = sbr.rel (%p228) target = $region40
      $region39: #{feature_extractor_1dcnn.1} parent=5 // pred_region
        // Predicated region
        $region41: #{feature_extractor_1dcnn.1} parent=39 // pred_check
          %p231 = pneg %p36
        $region42: #{feature_extractor_1dcnn.1} parent=39 // pred_check_branch
          %233 = sbr.rel (%p231) target = $region44
        $region43: #{feature_extractor_1dcnn.1} parent=39 // pred_region
          %p234 = scmp.lt.s32.totalorder %s16, 1
          %s235 = scalar_select %p234, %s16, 1
          %s236 = smul.addr %s235, 2
          %s237 = smul.addr %s236, 8
          %s238 = scalar_lea.vmem %s0, %s237
        $region44: #{feature_extractor_1dcnn.1} parent=39 // pred_fallthru
          _
      $region40: #{feature_extractor_1dcnn.1} parent=5 // pred_fallthru
        _
      %p239 = scmp.le.s32.totalorder 1, %s16
      %p240 = scmp.lt.s32.totalorder %s16, 3
      %p241 = pnand %p239, %p240
      %p242 = pneg %p241
      // Predicated region
      $region45: #{feature_extractor_1dcnn.1} parent=5 // pred_check
        _
      $region46: #{feature_extractor_1dcnn.1} parent=5 // pred_check_branch
        %244 = sbr.rel (%p241) target = $region48
      $region47: #{feature_extractor_1dcnn.1} parent=5 // pred_region
        %s245 = ssub.s32 %s16, 1
        %p246 = scmp.lt.s32.totalorder %s21, 1
        %s247 = scalar_select %p246, %s21, 1
        %s248 = smul.addr %s247, 2
        %s249 = smul.addr %s248, 8
        %s250 = scalar_lea.vmem %s0, %s249
        %p251 = pneg %p42
        %p252 = pneg %p39
        %p253 = pneg %p63
        %p254 = pneg %p60
        %p255 = pneg %p84
        %p256 = pneg %p81
        %p257 = pneg %p105
        %p258 = pneg %p102
        %p259 = pneg %p126
        %p260 = pneg %p123
        %p261 = pneg %p147
        %p262 = pneg %p144
        %p263 = pneg %p168
        %p264 = pneg %p165
        %p265 = pneg %p194
        %p266 = pneg %p191
        %s267 = sand.u32 %s181, 1
        %s268 = scalar_lea.sflag [#allocation9], %s267
        %s269 = sand.u32 %s181, 1
        %s270 = smul.addr %s269, 4
        %s271 = scalar_lea.vmem [#allocation8], %s270
        %p272 = scmp.lt.s32.totalorder %s21, 1
        %s273 = scalar_select %p272, %s21, 1
        %s274 = smul.addr %s273, 2
        %s275 = smul.addr %s274, 8
        %s276 = scalar_lea.vmem %s0, %s275
        %vm277 = vcmask 31744
        %278 = vst.msk [vmem:[#allocation2] sm:$0xff] %vm277, 0.0
        %279 = vst.msk [vmem:[#allocation2 + $0x8] sm:$0xff] %vm277, 0.0
        %280 = vst.msk [vmem:[#allocation2 + $0x10] sm:$0xff] %vm277, 0.0
        %v281 = vld [vmem:[%s276] sm:$0xff]
        %v282 = vld [vmem:[%s276 + $0x8] sm:$0xff]
        %283 = vst.msk [vmem:[#allocation2 + $0x4] sm:$0xff] %vm277, %v281
        %284 = vst.msk [vmem:[#allocation2 + $0xc] sm:$0xff] %vm277, %v282
        %v285 = vld [vmem:[#allocation2] sm:$0xff]
        %v286 = vld [vmem:[#allocation2 + $0x8] sm:$0xff]
        %v287 = vld [vmem:[#allocation2 + $0x10] sm:$0x1]
        %v288 = vld [vmem:[%s1] sm:$0xf]
        %v289 = vld [vmem:[#allocation2 + $0x1] sm:$0xff]
        %v290 = vld [vmem:[#allocation2 + $0x9] sm:$0xff]
        %v291 = vld [vmem:[#allocation2 + $0x11] sm:$0x1]
        %s292 = scalar_lea.vmem %s1, 4
        %v293 = vld [vmem:[%s292] sm:$0xf]
        %v295 = vsel %vm277, %v289, 0
        %v298 = vsel %vm277, %v290, 0
        %v301 = vsel %vm277, %v291, 0
        %vm303 = vcmask 1043456
        %v305 = vsel %vm303, %v293, 0
        %307 = vmatpush.msra.mxu0 0.0
        %308 = vmatpush.msra.mxu0 0.0
        %309 = vmatpush.msra.mxu0 0.0
        %310 = vmatpush.msra.mxu0 0.0
        %311 = vmatpush.msra.mxu0 0.0
        %312 = vmatpush.msra.mxu0 0.0
        %313 = vmatpush.msra.mxu0 0.0
        %314 = vmatpush.msra.mxu0 0.0
        %315 = vmatpush.msra.mxu0 0.0
        %316 = vmatpush.msra.mxu0 0.0
        %317 = vmatpush.msra.mxu0 0.0
        %318 = vmatpush.msra.mxu0 0.0
        %319 = vmatpush.msra.mxu0 0.0
        %320 = vmatpush.msra.mxu0 0.0
        %321 = vmatpush.msra.mxu0 0.0
        %322 = vmatpush.msra.mxu0 %v305
        %323 = vmatmul.f32.gmra.mxu0 %v295
        %v324 = vpop.f32.mrf.mxu0
        %v325 = vadd.f32 0.0, %v324
        %326 = vmatmul.f32.gmra.mxu0 %v298
        %v327 = vpop.f32.mrf.mxu0
        %v328 = vadd.f32 0.0, %v327
        %329 = vmatmul.f32.gmra.mxu0 %v301
        %v330 = vpop.f32.mrf.mxu0
        %v331 = vadd.f32 0.0, %v330
        %332 = vdwg.mxu0
        %v334 = vsel %vm277, %v285, 0
        %v337 = vsel %vm277, %v286, 0
        %v340 = vsel %vm277, %v287, 0
        %v343 = vsel %vm303, %v288, 0
        %345 = vmatpush.msra.mxu0 0.0
        %346 = vmatpush.msra.mxu0 0.0
        %347 = vmatpush.msra.mxu0 0.0
        %348 = vmatpush.msra.mxu0 0.0
        %349 = vmatpush.msra.mxu0 0.0
        %350 = vmatpush.msra.mxu0 0.0
        %351 = vmatpush.msra.mxu0 0.0
        %352 = vmatpush.msra.mxu0 0.0
        %353 = vmatpush.msra.mxu0 0.0
        %354 = vmatpush.msra.mxu0 0.0
        %355 = vmatpush.msra.mxu0 0.0
        %356 = vmatpush.msra.mxu0 0.0
        %357 = vmatpush.msra.mxu0 0.0
        %358 = vmatpush.msra.mxu0 0.0
        %359 = vmatpush.msra.mxu0 0.0
        %360 = vmatpush.msra.mxu0 %v343
        %361 = vmatmul.f32.gmra.mxu0 %v334
        %v362 = vpop.f32.mrf.mxu0
        %v363 = vadd.f32 %v325, %v362
        %364 = vmatmul.f32.gmra.mxu0 %v337
        %v365 = vpop.f32.mrf.mxu0
        %v366 = vadd.f32 %v328, %v365
        %367 = vmatmul.f32.gmra.mxu0 %v340
        %v368 = vpop.f32.mrf.mxu0
        %v369 = vadd.f32 %v331, %v368
        %370 = vdwg.mxu0
        %v371 = vld [vmem:[#allocation2 + $0x2] sm:$0xff]
        %v372 = vld [vmem:[#allocation2 + $0xa] sm:$0xff]
        %v373 = vld [vmem:[#allocation2 + $0x12] sm:$0x1]
        %s374 = scalar_lea.vmem %s1, 8
        %v375 = vld [vmem:[%s374] sm:$0xf]
        %v377 = vsel %vm277, %v371, 0
        %v380 = vsel %vm277, %v372, 0
        %v383 = vsel %vm277, %v373, 0
        %v386 = vsel %vm303, %v375, 0
        %388 = vmatpush.msra.mxu0 0.0
        %389 = vmatpush.msra.mxu0 0.0
        %390 = vmatpush.msra.mxu0 0.0
        %391 = vmatpush.msra.mxu0 0.0
        %392 = vmatpush.msra.mxu0 0.0
        %393 = vmatpush.msra.mxu0 0.0
        %394 = vmatpush.msra.mxu0 0.0
        %395 = vmatpush.msra.mxu0 0.0
        %396 = vmatpush.msra.mxu0 0.0
        %397 = vmatpush.msra.mxu0 0.0
        %398 = vmatpush.msra.mxu0 0.0
        %399 = vmatpush.msra.mxu0 0.0
        %400 = vmatpush.msra.mxu0 0.0
        %401 = vmatpush.msra.mxu0 0.0
        %402 = vmatpush.msra.mxu0 0.0
        %403 = vmatpush.msra.mxu0 %v386
        %404 = vmatmul.f32.gmra.mxu0 %v377
        %v405 = vpop.f32.mrf.mxu0
        %v406 = vadd.f32 0.0, %v405
        %407 = vmatmul.f32.gmra.mxu0 %v380
        %v408 = vpop.f32.mrf.mxu0
        %v409 = vadd.f32 0.0, %v408
        %410 = vmatmul.f32.gmra.mxu0 %v383
        %v411 = vpop.f32.mrf.mxu0
        %v412 = vadd.f32 0.0, %v411
        %413 = vdwg.mxu0
        %v414 = vadd.f32 %v363, %v406
        %v415 = vadd.f32 %v366, %v409
        %v416 = vadd.f32 %v369, %v412
        %v417 = vld [vmem:[#allocation2 + $0x3] sm:$0xff]
        %v418 = vld [vmem:[#allocation2 + $0xb] sm:$0xff]
        %v419 = vld [vmem:[#allocation2 + $0x13] sm:$0x1]
        %s420 = scalar_lea.vmem %s1, 12
        %v421 = vld [vmem:[%s420] sm:$0xf]
        %v423 = vsel %vm277, %v417, 0
        %v426 = vsel %vm277, %v418, 0
        %v429 = vsel %vm277, %v419, 0
        %v432 = vsel %vm303, %v421, 0
        %434 = vmatpush.msra.mxu0 0.0
        %435 = vmatpush.msra.mxu0 0.0
        %436 = vmatpush.msra.mxu0 0.0
        %437 = vmatpush.msra.mxu0 0.0
        %438 = vmatpush.msra.mxu0 0.0
        %439 = vmatpush.msra.mxu0 0.0
        %440 = vmatpush.msra.mxu0 0.0
        %441 = vmatpush.msra.mxu0 0.0
        %442 = vmatpush.msra.mxu0 0.0
        %443 = vmatpush.msra.mxu0 0.0
        %444 = vmatpush.msra.mxu0 0.0
        %445 = vmatpush.msra.mxu0 0.0
        %446 = vmatpush.msra.mxu0 0.0
        %447 = vmatpush.msra.mxu0 0.0
        %448 = vmatpush.msra.mxu0 0.0
        %449 = vmatpush.msra.mxu0 %v432
        %450 = vmatmul.f32.gmra.mxu0 %v423
        %v451 = vpop.f32.mrf.mxu0
        %v452 = vadd.f32 0.0, %v451
        %453 = vmatmul.f32.gmra.mxu0 %v426
        %v454 = vpop.f32.mrf.mxu0
        %v455 = vadd.f32 0.0, %v454
        %456 = vmatmul.f32.gmra.mxu0 %v429
        %v457 = vpop.f32.mrf.mxu0
        %v458 = vadd.f32 0.0, %v457
        %459 = vdwg.mxu0
        %v460 = vadd.f32 %v414, %v452
        %v461 = vadd.f32 %v415, %v455
        %v462 = vadd.f32 %v416, %v458
        %v463 = vld [vmem:[#allocation2 + $0x4] sm:$0xff]
        %v464 = vld [vmem:[#allocation2 + $0xc] sm:$0xff]
        %v465 = vld [vmem:[#allocation2 + $0x14] sm:$0x1]
        %s466 = scalar_lea.vmem %s1, 16
        %v467 = vld [vmem:[%s466] sm:$0xf]
        %v469 = vsel %vm277, %v463, 0
        %v472 = vsel %vm277, %v464, 0
        %v475 = vsel %vm277, %v465, 0
        %v478 = vsel %vm303, %v467, 0
        %480 = vmatpush.msra.mxu0 0.0
        %481 = vmatpush.msra.mxu0 0.0
        %482 = vmatpush.msra.mxu0 0.0
        %483 = vmatpush.msra.mxu0 0.0
        %484 = vmatpush.msra.mxu0 0.0
        %485 = vmatpush.msra.mxu0 0.0
        %486 = vmatpush.msra.mxu0 0.0
        %487 = vmatpush.msra.mxu0 0.0
        %488 = vmatpush.msra.mxu0 0.0
        %489 = vmatpush.msra.mxu0 0.0
        %490 = vmatpush.msra.mxu0 0.0
        %491 = vmatpush.msra.mxu0 0.0
        %492 = vmatpush.msra.mxu0 0.0
        %493 = vmatpush.msra.mxu0 0.0
        %494 = vmatpush.msra.mxu0 0.0
        %495 = vmatpush.msra.mxu0 %v478
        %496 = vmatmul.f32.gmra.mxu0 %v469
        %v497 = vpop.f32.mrf.mxu0
        %v498 = vadd.f32 0.0, %v497
        %499 = vmatmul.f32.gmra.mxu0 %v472
        %v500 = vpop.f32.mrf.mxu0
        %v501 = vadd.f32 0.0, %v500
        %502 = vmatmul.f32.gmra.mxu0 %v475
        %v503 = vpop.f32.mrf.mxu0
        %v504 = vadd.f32 0.0, %v503
        %505 = vdwg.mxu0
        %v506 = vadd.f32 %v460, %v498
        %v507 = vadd.f32 %v461, %v501
        %v508 = vadd.f32 %v462, %v504
        %v509 = vld [vmem:[#allocation2 + $0x5] sm:$0xff]
        %v510 = vld [vmem:[#allocation2 + $0xd] sm:$0xff]
        %v511 = vld [vmem:[#allocation2 + $0x15] sm:$0x1]
        %s512 = scalar_lea.vmem %s1, 20
        %v513 = vld [vmem:[%s512] sm:$0xf]
        %v515 = vsel %vm277, %v509, 0
        %v518 = vsel %vm277, %v510, 0
        %v521 = vsel %vm277, %v511, 0
        %v524 = vsel %vm303, %v513, 0
        %526 = vmatpush.msra.mxu0 0.0
        %527 = vmatpush.msra.mxu0 0.0
        %528 = vmatpush.msra.mxu0 0.0
        %529 = vmatpush.msra.mxu0 0.0
        %530 = vmatpush.msra.mxu0 0.0
        %531 = vmatpush.msra.mxu0 0.0
        %532 = vmatpush.msra.mxu0 0.0
        %533 = vmatpush.msra.mxu0 0.0
        %534 = vmatpush.msra.mxu0 0.0
        %535 = vmatpush.msra.mxu0 0.0
        %536 = vmatpush.msra.mxu0 0.0
        %537 = vmatpush.msra.mxu0 0.0
        %538 = vmatpush.msra.mxu0 0.0
        %539 = vmatpush.msra.mxu0 0.0
        %540 = vmatpush.msra.mxu0 0.0
        %541 = vmatpush.msra.mxu0 %v524
        %542 = vmatmul.f32.gmra.mxu0 %v515
        %v543 = vpop.f32.mrf.mxu0
        %v544 = vadd.f32 0.0, %v543
        %545 = vmatmul.f32.gmra.mxu0 %v518
        %v546 = vpop.f32.mrf.mxu0
        %v547 = vadd.f32 0.0, %v546
        %548 = vmatmul.f32.gmra.mxu0 %v521
        %v549 = vpop.f32.mrf.mxu0
        %v550 = vadd.f32 0.0, %v549
        %551 = vdwg.mxu0
        %v552 = vadd.f32 %v506, %v544
        %v553 = vadd.f32 %v507, %v547
        %v554 = vadd.f32 %v508, %v550
        %v555 = vld [vmem:[#allocation2 + $0x6] sm:$0xff]
        %v556 = vld [vmem:[#allocation2 + $0xe] sm:$0xff]
        %v557 = vld [vmem:[#allocation2 + $0x16] sm:$0x1]
        %s558 = scalar_lea.vmem %s1, 24
        %v559 = vld [vmem:[%s558] sm:$0xf]
        %v561 = vsel %vm277, %v555, 0
        %v564 = vsel %vm277, %v556, 0
        %v567 = vsel %vm277, %v557, 0
        %v570 = vsel %vm303, %v559, 0
        %572 = vmatpush.msra.mxu0 0.0
        %573 = vmatpush.msra.mxu0 0.0
        %574 = vmatpush.msra.mxu0 0.0
        %575 = vmatpush.msra.mxu0 0.0
        %576 = vmatpush.msra.mxu0 0.0
        %577 = vmatpush.msra.mxu0 0.0
        %578 = vmatpush.msra.mxu0 0.0
        %579 = vmatpush.msra.mxu0 0.0
        %580 = vmatpush.msra.mxu0 0.0
        %581 = vmatpush.msra.mxu0 0.0
        %582 = vmatpush.msra.mxu0 0.0
        %583 = vmatpush.msra.mxu0 0.0
        %584 = vmatpush.msra.mxu0 0.0
        %585 = vmatpush.msra.mxu0 0.0
        %586 = vmatpush.msra.mxu0 0.0
        %587 = vmatpush.msra.mxu0 %v570
        %588 = vmatmul.f32.gmra.mxu0 %v561
        %v589 = vpop.f32.mrf.mxu0
        %v590 = vadd.f32 0.0, %v589
        %591 = vmatmul.f32.gmra.mxu0 %v564
        %v592 = vpop.f32.mrf.mxu0
        %v593 = vadd.f32 0.0, %v592
        %594 = vmatmul.f32.gmra.mxu0 %v567
        %v595 = vpop.f32.mrf.mxu0
        %v596 = vadd.f32 0.0, %v595
        %597 = vdwg.mxu0
        %v598 = vadd.f32 %v552, %v590
        %v599 = vadd.f32 %v553, %v593
        %v600 = vadd.f32 %v554, %v596
        %v601 = vld [vmem:[#allocation2 + $0x7] sm:$0xff]
        %v602 = vld [vmem:[#allocation2 + $0xf] sm:$0xff]
        %v603 = vld [vmem:[#allocation2 + $0x17] sm:$0x1]
        %s604 = scalar_lea.vmem %s1, 28
        %v605 = vld [vmem:[%s604] sm:$0xf]
        %v607 = vsel %vm277, %v601, 0
        %v610 = vsel %vm277, %v602, 0
        %v613 = vsel %vm277, %v603, 0
        %v616 = vsel %vm303, %v605, 0
        %618 = vmatpush.msra.mxu0 0.0
        %619 = vmatpush.msra.mxu0 0.0
        %620 = vmatpush.msra.mxu0 0.0
        %621 = vmatpush.msra.mxu0 0.0
        %622 = vmatpush.msra.mxu0 0.0
        %623 = vmatpush.msra.mxu0 0.0
        %624 = vmatpush.msra.mxu0 0.0
        %625 = vmatpush.msra.mxu0 0.0
        %626 = vmatpush.msra.mxu0 0.0
        %627 = vmatpush.msra.mxu0 0.0
        %628 = vmatpush.msra.mxu0 0.0
        %629 = vmatpush.msra.mxu0 0.0
        %630 = vmatpush.msra.mxu0 0.0
        %631 = vmatpush.msra.mxu0 0.0
        %632 = vmatpush.msra.mxu0 0.0
        %633 = vmatpush.msra.mxu0 %v616
        %634 = vmatmul.f32.gmra.mxu0 %v607
        %v635 = vpop.f32.mrf.mxu0
        %v636 = vadd.f32 0.0, %v635
        %637 = vmatmul.f32.gmra.mxu0 %v610
        %v638 = vpop.f32.mrf.mxu0
        %v639 = vadd.f32 0.0, %v638
        %640 = vmatmul.f32.gmra.mxu0 %v613
        %v641 = vpop.f32.mrf.mxu0
        %v642 = vadd.f32 0.0, %v641
        %643 = vdwg.mxu0
        %v644 = vadd.f32 %v598, %v636
        %v645 = vadd.f32 %v599, %v639
        %v646 = vadd.f32 %v600, %v642
        %v647 = vld [vmem:[%s2] sm:$0x1]
        %v649 = vperm.slane %v647, 0
        %v651 = vadd.f32 %v644, %v649
        %v652 = vadd.f32 %v645, %v649
        %v653 = vadd.f32 %v646, %v649
        %v654 = vmax.f32 %v651, 0.0
        %v655 = vmax.f32 %v652, 0.0
        %v656 = vmax.f32 %v653, 0.0
        %vm657 = vcmask 64512
        %658 = vst.msk [vmem:[#allocation3] sm:$0xff] %vm657, 0.0
        %659 = vst.msk [vmem:[#allocation3 + $0x8] sm:$0xff] %vm657, 0.0
        %vm660 = vcmask 58368
        %661 = vst.msk [vmem:[#allocation3 + $0x10] sm:$0x3] %vm660, 0.0
        %662 = vst.msk [vmem:[#allocation3 + $0x1] sm:$0xff] %vm657, %v654
        %663 = vst.msk [vmem:[#allocation3 + $0x9] sm:$0xff] %vm657, %v655
        %vm664 = vcmask 57344
        %665 = vst.msk [vmem:[#allocation3 + $0x11] sm:$0x1] %vm664, %v656
        %v666 = vld [vmem:[#allocation3] ss:$2 sm:$0xff]
        %s667 = scalar_lea.vmem [#allocation3], 16
        %v668 = vld [vmem:[%s667] ss:$2 sm:$0x1]
        %s669 = scalar_lea.vmem [#allocation3], 1
        %v670 = vld [vmem:[%s669] ss:$2 sm:$0xff]
        %s671 = scalar_lea.vmem [#allocation3], 17
        %v672 = vld [vmem:[%s671] ss:$2 sm:$0x1]
        %v673 = vmax.f32 %v666, %v670
        %v674 = vmax.f32 %v668, %v672
        %675 = vst.msk [vmem:[#allocation4] sm:$0xff] %vm657, 0.0
        %676 = vst.msk [vmem:[#allocation4 + $0x8] sm:$0xff] %vm657, 0.0
        %677 = vst.msk [vmem:[#allocation4 + $0x10] sm:$0x1] %vm664, 0.0
        %678 = vst.msk [vmem:[#allocation4 + $0x4] sm:$0xff] %vm657, %v673
        %679 = vst.msk [vmem:[#allocation4 + $0xc] sm:$0x1] %vm664, %v674
        %v680 = vld [vmem:[#allocation4] sm:$0xff]
        %v681 = vld [vmem:[#allocation4 + $0x8] sm:$0x3]
        %v682 = vld [vmem:[%s3] sm:$0xff]
        %v683 = vld [vmem:[#allocation4 + $0x1] sm:$0xff]
        %v684 = vld [vmem:[#allocation4 + $0x9] sm:$0x3]
        %s685 = scalar_lea.vmem %s3, 8
        %v686 = vld [vmem:[%s685] sm:$0xff]
        %v688 = vsel %vm657, %v683, 0
        %v691 = vsel %vm657, %v684, 0
        %693 = vmatpush.msra.mxu0 0.0
        %694 = vmatpush.msra.mxu0 0.0
        %695 = vmatpush.msra.mxu0 0.0
        %696 = vmatpush.msra.mxu0 0.0
        %697 = vmatpush.msra.mxu0 0.0
        %698 = vmatpush.msra.mxu0 0.0
        %699 = vmatpush.msra.mxu0 0.0
        %700 = vmatpush.msra.mxu0 0.0
        %701 = vmatpush.msra.mxu0 0.0
        %702 = vmatpush.msra.mxu0 0.0
        %703 = vmatpush.msra.mxu0 0.0
        %704 = vmatpush.msra.mxu0 0.0
        %705 = vmatpush.msra.mxu0 0.0
        %706 = vmatpush.msra.mxu0 0.0
        %707 = vmatpush.msra.mxu0 0.0
        %708 = vmatpush.msra.mxu0 %v686
        %709 = vmatmul.f32.gmra.mxu0 %v688
        %v710 = vpop.f32.mrf.mxu0
        %v711 = vadd.f32 0.0, %v710
        %712 = vmatmul.f32.gmra.mxu0 %v691
        %v713 = vpop.f32.mrf.mxu0
        %v714 = vadd.f32 0.0, %v713
        %715 = vdwg.mxu0
        %v717 = vsel %vm657, %v680, 0
        %v720 = vsel %vm657, %v681, 0
        %722 = vmatpush.msra.mxu0 0.0
        %723 = vmatpush.msra.mxu0 0.0
        %724 = vmatpush.msra.mxu0 0.0
        %725 = vmatpush.msra.mxu0 0.0
        %726 = vmatpush.msra.mxu0 0.0
        %727 = vmatpush.msra.mxu0 0.0
        %728 = vmatpush.msra.mxu0 0.0
        %729 = vmatpush.msra.mxu0 0.0
        %730 = vmatpush.msra.mxu0 0.0
        %731 = vmatpush.msra.mxu0 0.0
        %732 = vmatpush.msra.mxu0 0.0
        %733 = vmatpush.msra.mxu0 0.0
        %734 = vmatpush.msra.mxu0 0.0
        %735 = vmatpush.msra.mxu0 0.0
        %736 = vmatpush.msra.mxu0 0.0
        %737 = vmatpush.msra.mxu0 %v682
        %738 = vmatmul.f32.gmra.mxu0 %v717
        %v739 = vpop.f32.mrf.mxu0
        %v740 = vadd.f32 %v711, %v739
        %741 = vmatmul.f32.gmra.mxu0 %v720
        %v742 = vpop.f32.mrf.mxu0
        %v743 = vadd.f32 %v714, %v742
        %744 = vdwg.mxu0
        %v745 = vld [vmem:[#allocation4 + $0x2] sm:$0xff]
        %v746 = vld [vmem:[#allocation4 + $0xa] sm:$0x3]
        %s747 = scalar_lea.vmem %s3, 16
        %v748 = vld [vmem:[%s747] sm:$0xff]
        %v750 = vsel %vm657, %v745, 0
        %v753 = vsel %vm657, %v746, 0
        %755 = vmatpush.msra.mxu0 0.0
        %756 = vmatpush.msra.mxu0 0.0
        %757 = vmatpush.msra.mxu0 0.0
        %758 = vmatpush.msra.mxu0 0.0
        %759 = vmatpush.msra.mxu0 0.0
        %760 = vmatpush.msra.mxu0 0.0
        %761 = vmatpush.msra.mxu0 0.0
        %762 = vmatpush.msra.mxu0 0.0
        %763 = vmatpush.msra.mxu0 0.0
        %764 = vmatpush.msra.mxu0 0.0
        %765 = vmatpush.msra.mxu0 0.0
        %766 = vmatpush.msra.mxu0 0.0
        %767 = vmatpush.msra.mxu0 0.0
        %768 = vmatpush.msra.mxu0 0.0
        %769 = vmatpush.msra.mxu0 0.0
        %770 = vmatpush.msra.mxu0 %v748
        %771 = vmatmul.f32.gmra.mxu0 %v750
        %v772 = vpop.f32.mrf.mxu0
        %v773 = vadd.f32 0.0, %v772
        %774 = vmatmul.f32.gmra.mxu0 %v753
        %v775 = vpop.f32.mrf.mxu0
        %v776 = vadd.f32 0.0, %v775
        %777 = vdwg.mxu0
        %v778 = vadd.f32 %v740, %v773
        %v779 = vadd.f32 %v743, %v776
        %v780 = vld [vmem:[#allocation4 + $0x3] sm:$0xff]
        %v781 = vld [vmem:[#allocation4 + $0xb] sm:$0x3]
        %s782 = scalar_lea.vmem %s3, 24
        %v783 = vld [vmem:[%s782] sm:$0xff]
        %v785 = vsel %vm657, %v780, 0
        %v788 = vsel %vm657, %v781, 0
        %790 = vmatpush.msra.mxu0 0.0
        %791 = vmatpush.msra.mxu0 0.0
        %792 = vmatpush.msra.mxu0 0.0
        %793 = vmatpush.msra.mxu0 0.0
        %794 = vmatpush.msra.mxu0 0.0
        %795 = vmatpush.msra.mxu0 0.0
        %796 = vmatpush.msra.mxu0 0.0
        %797 = vmatpush.msra.mxu0 0.0
        %798 = vmatpush.msra.mxu0 0.0
        %799 = vmatpush.msra.mxu0 0.0
        %800 = vmatpush.msra.mxu0 0.0
        %801 = vmatpush.msra.mxu0 0.0
        %802 = vmatpush.msra.mxu0 0.0
        %803 = vmatpush.msra.mxu0 0.0
        %804 = vmatpush.msra.mxu0 0.0
        %805 = vmatpush.msra.mxu0 %v783
        %806 = vmatmul.f32.gmra.mxu0 %v785
        %v807 = vpop.f32.mrf.mxu0
        %v808 = vadd.f32 0.0, %v807
        %809 = vmatmul.f32.gmra.mxu0 %v788
        %v810 = vpop.f32.mrf.mxu0
        %v811 = vadd.f32 0.0, %v810
        %812 = vdwg.mxu0
        %v813 = vadd.f32 %v778, %v808
        %v814 = vadd.f32 %v779, %v811
        %v815 = vld [vmem:[#allocation4 + $0x4] sm:$0xff]
        %v816 = vld [vmem:[#allocation4 + $0xc] sm:$0x3]
        %s817 = scalar_lea.vmem %s3, 32
        %v818 = vld [vmem:[%s817] sm:$0xff]
        %v820 = vsel %vm657, %v815, 0
        %v823 = vsel %vm657, %v816, 0
        %825 = vmatpush.msra.mxu0 0.0
        %826 = vmatpush.msra.mxu0 0.0
        %827 = vmatpush.msra.mxu0 0.0
        %828 = vmatpush.msra.mxu0 0.0
        %829 = vmatpush.msra.mxu0 0.0
        %830 = vmatpush.msra.mxu0 0.0
        %831 = vmatpush.msra.mxu0 0.0
        %832 = vmatpush.msra.mxu0 0.0
        %833 = vmatpush.msra.mxu0 0.0
        %834 = vmatpush.msra.mxu0 0.0
        %835 = vmatpush.msra.mxu0 0.0
        %836 = vmatpush.msra.mxu0 0.0
        %837 = vmatpush.msra.mxu0 0.0
        %838 = vmatpush.msra.mxu0 0.0
        %839 = vmatpush.msra.mxu0 0.0
        %840 = vmatpush.msra.mxu0 %v818
        %841 = vmatmul.f32.gmra.mxu0 %v820
        %v842 = vpop.f32.mrf.mxu0
        %v843 = vadd.f32 0.0, %v842
        %844 = vmatmul.f32.gmra.mxu0 %v823
        %v845 = vpop.f32.mrf.mxu0
        %v846 = vadd.f32 0.0, %v845
        %847 = vdwg.mxu0
        %v848 = vadd.f32 %v813, %v843
        %v849 = vadd.f32 %v814, %v846
        %v850 = vld [vmem:[#allocation4 + $0x5] sm:$0xff]
        %v851 = vld [vmem:[#allocation4 + $0xd] sm:$0x3]
        %s852 = scalar_lea.vmem %s3, 40
        %v853 = vld [vmem:[%s852] sm:$0xff]
        %v855 = vsel %vm657, %v850, 0
        %v858 = vsel %vm657, %v851, 0
        %860 = vmatpush.msra.mxu0 0.0
        %861 = vmatpush.msra.mxu0 0.0
        %862 = vmatpush.msra.mxu0 0.0
        %863 = vmatpush.msra.mxu0 0.0
        %864 = vmatpush.msra.mxu0 0.0
        %865 = vmatpush.msra.mxu0 0.0
        %866 = vmatpush.msra.mxu0 0.0
        %867 = vmatpush.msra.mxu0 0.0
        %868 = vmatpush.msra.mxu0 0.0
        %869 = vmatpush.msra.mxu0 0.0
        %870 = vmatpush.msra.mxu0 0.0
        %871 = vmatpush.msra.mxu0 0.0
        %872 = vmatpush.msra.mxu0 0.0
        %873 = vmatpush.msra.mxu0 0.0
        %874 = vmatpush.msra.mxu0 0.0
        %875 = vmatpush.msra.mxu0 %v853
        %876 = vmatmul.f32.gmra.mxu0 %v855
        %v877 = vpop.f32.mrf.mxu0
        %v878 = vadd.f32 0.0, %v877
        %879 = vmatmul.f32.gmra.mxu0 %v858
        %v880 = vpop.f32.mrf.mxu0
        %v881 = vadd.f32 0.0, %v880
        %882 = vdwg.mxu0
        %v883 = vadd.f32 %v848, %v878
        %v884 = vadd.f32 %v849, %v881
        %v885 = vld [vmem:[#allocation4 + $0x6] sm:$0xff]
        %v886 = vld [vmem:[#allocation4 + $0xe] sm:$0x3]
        %s887 = scalar_lea.vmem %s3, 48
        %v888 = vld [vmem:[%s887] sm:$0xff]
        %v890 = vsel %vm657, %v885, 0
        %v893 = vsel %vm657, %v886, 0
        %895 = vmatpush.msra.mxu0 0.0
        %896 = vmatpush.msra.mxu0 0.0
        %897 = vmatpush.msra.mxu0 0.0
        %898 = vmatpush.msra.mxu0 0.0
        %899 = vmatpush.msra.mxu0 0.0
        %900 = vmatpush.msra.mxu0 0.0
        %901 = vmatpush.msra.mxu0 0.0
        %902 = vmatpush.msra.mxu0 0.0
        %903 = vmatpush.msra.mxu0 0.0
        %904 = vmatpush.msra.mxu0 0.0
        %905 = vmatpush.msra.mxu0 0.0
        %906 = vmatpush.msra.mxu0 0.0
        %907 = vmatpush.msra.mxu0 0.0
        %908 = vmatpush.msra.mxu0 0.0
        %909 = vmatpush.msra.mxu0 0.0
        %910 = vmatpush.msra.mxu0 %v888
        %911 = vmatmul.f32.gmra.mxu0 %v890
        %v912 = vpop.f32.mrf.mxu0
        %v913 = vadd.f32 0.0, %v912
        %914 = vmatmul.f32.gmra.mxu0 %v893
        %v915 = vpop.f32.mrf.mxu0
        %v916 = vadd.f32 0.0, %v915
        %917 = vdwg.mxu0
        %v918 = vadd.f32 %v883, %v913
        %v919 = vadd.f32 %v884, %v916
        %v920 = vld [vmem:[#allocation4 + $0x7] sm:$0xff]
        %v921 = vld [vmem:[#allocation4 + $0xf] sm:$0x3]
        %s922 = scalar_lea.vmem %s3, 56
        %v923 = vld [vmem:[%s922] sm:$0xff]
        %v925 = vsel %vm657, %v920, 0
        %v928 = vsel %vm657, %v921, 0
        %930 = vmatpush.msra.mxu0 0.0
        %931 = vmatpush.msra.mxu0 0.0
        %932 = vmatpush.msra.mxu0 0.0
        %933 = vmatpush.msra.mxu0 0.0
        %934 = vmatpush.msra.mxu0 0.0
        %935 = vmatpush.msra.mxu0 0.0
        %936 = vmatpush.msra.mxu0 0.0
        %937 = vmatpush.msra.mxu0 0.0
        %938 = vmatpush.msra.mxu0 0.0
        %939 = vmatpush.msra.mxu0 0.0
        %940 = vmatpush.msra.mxu0 0.0
        %941 = vmatpush.msra.mxu0 0.0
        %942 = vmatpush.msra.mxu0 0.0
        %943 = vmatpush.msra.mxu0 0.0
        %944 = vmatpush.msra.mxu0 0.0
        %945 = vmatpush.msra.mxu0 %v923
        %946 = vmatmul.f32.gmra.mxu0 %v925
        %v947 = vpop.f32.mrf.mxu0
        %v948 = vadd.f32 0.0, %v947
        %949 = vmatmul.f32.gmra.mxu0 %v928
        %v950 = vpop.f32.mrf.mxu0
        %v951 = vadd.f32 0.0, %v950
        %952 = vdwg.mxu0
        %v953 = vadd.f32 %v918, %v948
        %v954 = vadd.f32 %v919, %v951
        %v955 = vld [vmem:[%s4] sm:$0x1]
        %v957 = vperm.slane %v955, 0
        %v959 = vadd.f32 %v953, %v957
        %v960 = vadd.f32 %v954, %v957
        %v961 = vmax.f32 %v959, 0.0
        %v962 = vmax.f32 %v960, 0.0
        %vm963 = vcmask 130048
        %964 = vst.msk [vmem:[#allocation5] sm:$0xff] %vm963, 0.0
        %vm965 = vcmask 125952
        %966 = vst.msk [vmem:[#allocation5 + $0x8] sm:$0xf] %vm965, 0.0
        %967 = vst.msk [vmem:[#allocation5 + $0x1] sm:$0xff] %vm963, %v961
        %vm968 = vcmask 123904
        %969 = vst.msk [vmem:[#allocation5 + $0x9] sm:$0x3] %vm968, %v962
        %v970 = vld [vmem:[#allocation5] ss:$2 sm:$0x3f]
        %s971 = scalar_lea.vmem [#allocation5], 1
        %v972 = vld [vmem:[%s971] ss:$2 sm:$0x3f]
        %v973 = vmax.f32 %v970, %v972
        %974 = vst.msk [vmem:[#allocation6] sm:$0xff] %vm963, 0.0
        %vm975 = vcmask 128000
        %976 = vst.msk [vmem:[#allocation6 + $0x8] sm:$0x3f] %vm975, 0.0
        %977 = vst.msk [vmem:[#allocation6 + $0x4] sm:$0x3f] %vm975, %v973
        %v978 = vld [vmem:[#allocation6] sm:$0x7f]
        %v979 = vld [vmem:[%s5] sm:$0xff]
        %v980 = vld [vmem:[%s5 + $0x8] sm:$0xff]
        %v981 = vld [vmem:[#allocation6 + $0x1] sm:$0x7f]
        %s982 = scalar_lea.vmem %s5, 16
        %v983 = vld [vmem:[%s982] sm:$0xff]
        %v984 = vld [vmem:[%s982 + $0x8] sm:$0xff]
        %v986 = vsel %vm963, %v981, 0
        %988 = vmatpush.msra.mxu0 0.0
        %989 = vmatpush.msra.mxu0 0.0
        %990 = vmatpush.msra.mxu0 0.0
        %991 = vmatpush.msra.mxu0 0.0
        %992 = vmatpush.msra.mxu0 0.0
        %993 = vmatpush.msra.mxu0 0.0
        %994 = vmatpush.msra.mxu0 0.0
        %995 = vmatpush.msra.mxu0 0.0
        %996 = vmatpush.msra.mxu0 0.0
        %997 = vmatpush.msra.mxu0 0.0
        %998 = vmatpush.msra.mxu0 0.0
        %999 = vmatpush.msra.mxu0 0.0
        %1000 = vmatpush.msra.mxu0 0.0
        %1001 = vmatpush.msra.mxu0 0.0
        %1002 = vmatpush.msra.mxu0 %v984
        %1003 = vmatpush.msra.mxu0 %v983
        %1004 = vmatmul.f32.gmra.mxu0 %v986
        %v1005 = vpop.f32.mrf.mxu0
        %v1006 = vadd.f32 0.0, %v1005
        %1007 = vdwg.mxu0
        %v1009 = vsel %vm963, %v978, 0
        %1011 = vmatpush.msra.mxu0 0.0
        %1012 = vmatpush.msra.mxu0 0.0
        %1013 = vmatpush.msra.mxu0 0.0
        %1014 = vmatpush.msra.mxu0 0.0
        %1015 = vmatpush.msra.mxu0 0.0
        %1016 = vmatpush.msra.mxu0 0.0
        %1017 = vmatpush.msra.mxu0 0.0
        %1018 = vmatpush.msra.mxu0 0.0
        %1019 = vmatpush.msra.mxu0 0.0
        %1020 = vmatpush.msra.mxu0 0.0
        %1021 = vmatpush.msra.mxu0 0.0
        %1022 = vmatpush.msra.mxu0 0.0
        %1023 = vmatpush.msra.mxu0 0.0
        %1024 = vmatpush.msra.mxu0 0.0
        %1025 = vmatpush.msra.mxu0 %v980
        %1026 = vmatpush.msra.mxu0 %v979
        %1027 = vmatmul.f32.gmra.mxu0 %v1009
        %v1028 = vpop.f32.mrf.mxu0
        %v1029 = vadd.f32 %v1006, %v1028
        %1030 = vdwg.mxu0
        %v1031 = vld [vmem:[#allocation6 + $0x2] sm:$0x7f]
        %s1032 = scalar_lea.vmem %s5, 32
        %v1033 = vld [vmem:[%s1032] sm:$0xff]
        %v1034 = vld [vmem:[%s1032 + $0x8] sm:$0xff]
        %v1036 = vsel %vm963, %v1031, 0
        %1038 = vmatpush.msra.mxu0 0.0
        %1039 = vmatpush.msra.mxu0 0.0
        %1040 = vmatpush.msra.mxu0 0.0
        %1041 = vmatpush.msra.mxu0 0.0
        %1042 = vmatpush.msra.mxu0 0.0
        %1043 = vmatpush.msra.mxu0 0.0
        %1044 = vmatpush.msra.mxu0 0.0
        %1045 = vmatpush.msra.mxu0 0.0
        %1046 = vmatpush.msra.mxu0 0.0
        %1047 = vmatpush.msra.mxu0 0.0
        %1048 = vmatpush.msra.mxu0 0.0
        %1049 = vmatpush.msra.mxu0 0.0
        %1050 = vmatpush.msra.mxu0 0.0
        %1051 = vmatpush.msra.mxu0 0.0
        %1052 = vmatpush.msra.mxu0 %v1034
        %1053 = vmatpush.msra.mxu0 %v1033
        %1054 = vmatmul.f32.gmra.mxu0 %v1036
        %v1055 = vpop.f32.mrf.mxu0
        %v1056 = vadd.f32 0.0, %v1055
        %1057 = vdwg.mxu0
        %v1058 = vadd.f32 %v1029, %v1056
        %v1059 = vld [vmem:[#allocation6 + $0x3] sm:$0x7f]
        %s1060 = scalar_lea.vmem %s5, 48
        %v1061 = vld [vmem:[%s1060] sm:$0xff]
        %v1062 = vld [vmem:[%s1060 + $0x8] sm:$0xff]
        %v1064 = vsel %vm963, %v1059, 0
        %1066 = vmatpush.msra.mxu0 0.0
        %1067 = vmatpush.msra.mxu0 0.0
        %1068 = vmatpush.msra.mxu0 0.0
        %1069 = vmatpush.msra.mxu0 0.0
        %1070 = vmatpush.msra.mxu0 0.0
        %1071 = vmatpush.msra.mxu0 0.0
        %1072 = vmatpush.msra.mxu0 0.0
        %1073 = vmatpush.msra.mxu0 0.0
        %1074 = vmatpush.msra.mxu0 0.0
        %1075 = vmatpush.msra.mxu0 0.0
        %1076 = vmatpush.msra.mxu0 0.0
        %1077 = vmatpush.msra.mxu0 0.0
        %1078 = vmatpush.msra.mxu0 0.0
        %1079 = vmatpush.msra.mxu0 0.0
        %1080 = vmatpush.msra.mxu0 %v1062
        %1081 = vmatpush.msra.mxu0 %v1061
        %1082 = vmatmul.f32.gmra.mxu0 %v1064
        %v1083 = vpop.f32.mrf.mxu0
        %v1084 = vadd.f32 0.0, %v1083
        %1085 = vdwg.mxu0
        %v1086 = vadd.f32 %v1058, %v1084
        %v1087 = vld [vmem:[#allocation6 + $0x4] sm:$0x7f]
        %s1088 = scalar_lea.vmem %s5, 64
        %v1089 = vld [vmem:[%s1088] sm:$0xff]
        %v1090 = vld [vmem:[%s1088 + $0x8] sm:$0xff]
        %v1092 = vsel %vm963, %v1087, 0
        %1094 = vmatpush.msra.mxu0 0.0
        %1095 = vmatpush.msra.mxu0 0.0
        %1096 = vmatpush.msra.mxu0 0.0
        %1097 = vmatpush.msra.mxu0 0.0
        %1098 = vmatpush.msra.mxu0 0.0
        %1099 = vmatpush.msra.mxu0 0.0
        %1100 = vmatpush.msra.mxu0 0.0
        %1101 = vmatpush.msra.mxu0 0.0
        %1102 = vmatpush.msra.mxu0 0.0
        %1103 = vmatpush.msra.mxu0 0.0
        %1104 = vmatpush.msra.mxu0 0.0
        %1105 = vmatpush.msra.mxu0 0.0
        %1106 = vmatpush.msra.mxu0 0.0
        %1107 = vmatpush.msra.mxu0 0.0
        %1108 = vmatpush.msra.mxu0 %v1090
        %1109 = vmatpush.msra.mxu0 %v1089
        %1110 = vmatmul.f32.gmra.mxu0 %v1092
        %v1111 = vpop.f32.mrf.mxu0
        %v1112 = vadd.f32 0.0, %v1111
        %1113 = vdwg.mxu0
        %v1114 = vadd.f32 %v1086, %v1112
        %v1115 = vld [vmem:[#allocation6 + $0x5] sm:$0x7f]
        %s1116 = scalar_lea.vmem %s5, 80
        %v1117 = vld [vmem:[%s1116] sm:$0xff]
        %v1118 = vld [vmem:[%s1116 + $0x8] sm:$0xff]
        %v1120 = vsel %vm963, %v1115, 0
        %1122 = vmatpush.msra.mxu0 0.0
        %1123 = vmatpush.msra.mxu0 0.0
        %1124 = vmatpush.msra.mxu0 0.0
        %1125 = vmatpush.msra.mxu0 0.0
        %1126 = vmatpush.msra.mxu0 0.0
        %1127 = vmatpush.msra.mxu0 0.0
        %1128 = vmatpush.msra.mxu0 0.0
        %1129 = vmatpush.msra.mxu0 0.0
        %1130 = vmatpush.msra.mxu0 0.0
        %1131 = vmatpush.msra.mxu0 0.0
        %1132 = vmatpush.msra.mxu0 0.0
        %1133 = vmatpush.msra.mxu0 0.0
        %1134 = vmatpush.msra.mxu0 0.0
        %1135 = vmatpush.msra.mxu0 0.0
        %1136 = vmatpush.msra.mxu0 %v1118
        %1137 = vmatpush.msra.mxu0 %v1117
        %1138 = vmatmul.f32.gmra.mxu0 %v1120
        %v1139 = vpop.f32.mrf.mxu0
        %v1140 = vadd.f32 0.0, %v1139
        %1141 = vdwg.mxu0
        %v1142 = vadd.f32 %v1114, %v1140
        %v1143 = vld [vmem:[#allocation6 + $0x6] sm:$0x7f]
        %s1144 = scalar_lea.vmem %s5, 96
        %v1145 = vld [vmem:[%s1144] sm:$0xff]
        %v1146 = vld [vmem:[%s1144 + $0x8] sm:$0xff]
        %v1148 = vsel %vm963, %v1143, 0
        %1150 = vmatpush.msra.mxu0 0.0
        %1151 = vmatpush.msra.mxu0 0.0
        %1152 = vmatpush.msra.mxu0 0.0
        %1153 = vmatpush.msra.mxu0 0.0
        %1154 = vmatpush.msra.mxu0 0.0
        %1155 = vmatpush.msra.mxu0 0.0
        %1156 = vmatpush.msra.mxu0 0.0
        %1157 = vmatpush.msra.mxu0 0.0
        %1158 = vmatpush.msra.mxu0 0.0
        %1159 = vmatpush.msra.mxu0 0.0
        %1160 = vmatpush.msra.mxu0 0.0
        %1161 = vmatpush.msra.mxu0 0.0
        %1162 = vmatpush.msra.mxu0 0.0
        %1163 = vmatpush.msra.mxu0 0.0
        %1164 = vmatpush.msra.mxu0 %v1146
        %1165 = vmatpush.msra.mxu0 %v1145
        %1166 = vmatmul.f32.gmra.mxu0 %v1148
        %v1167 = vpop.f32.mrf.mxu0
        %v1168 = vadd.f32 0.0, %v1167
        %1169 = vdwg.mxu0
        %v1170 = vadd.f32 %v1142, %v1168
        %v1171 = vld [vmem:[#allocation6 + $0x7] sm:$0x7f]
        %s1172 = scalar_lea.vmem %s5, 112
        %v1173 = vld [vmem:[%s1172] sm:$0xff]
        %v1174 = vld [vmem:[%s1172 + $0x8] sm:$0xff]
        %v1176 = vsel %vm963, %v1171, 0
        %1178 = vmatpush.msra.mxu0 0.0
        %1179 = vmatpush.msra.mxu0 0.0
        %1180 = vmatpush.msra.mxu0 0.0
        %1181 = vmatpush.msra.mxu0 0.0
        %1182 = vmatpush.msra.mxu0 0.0
        %1183 = vmatpush.msra.mxu0 0.0
        %1184 = vmatpush.msra.mxu0 0.0
        %1185 = vmatpush.msra.mxu0 0.0
        %1186 = vmatpush.msra.mxu0 0.0
        %1187 = vmatpush.msra.mxu0 0.0
        %1188 = vmatpush.msra.mxu0 0.0
        %1189 = vmatpush.msra.mxu0 0.0
        %1190 = vmatpush.msra.mxu0 0.0
        %1191 = vmatpush.msra.mxu0 0.0
        %1192 = vmatpush.msra.mxu0 %v1174
        %1193 = vmatpush.msra.mxu0 %v1173
        %1194 = vmatmul.f32.gmra.mxu0 %v1176
        %v1195 = vpop.f32.mrf.mxu0
        %v1196 = vadd.f32 0.0, %v1195
        %1197 = vdwg.mxu0
        %v1198 = vadd.f32 %v1170, %v1196
        %v1199 = vld [vmem:[%s6] sm:$0x1]
        %v1201 = vperm.slane %v1199, 0
        %v1203 = vadd.f32 %v1198, %v1201
        %v1204 = vmax.f32 %v1203, 0.0
        %vm1205 = vcmask 261120
        %1206 = vst.msk [vmem:[#allocation7] sm:$0xff] %vm1205, 0.0
        %vm1207 = vcmask 260096
        %1208 = vst.msk [vmem:[#allocation7 + $0x1] sm:$0x7f] %vm1207, %v1204
        %v1209 = vld [vmem:[#allocation7] ss:$2 sm:$0xf]
        %s1210 = scalar_lea.vmem [#allocation7], 1
        %v1211 = vld [vmem:[%s1210] ss:$2 sm:$0xf]
        %v1212 = vmax.f32 %v1209, %v1211
        %vm1213 = vcmask 257024
        %1214 = vst.msk [vmem:[%s271] sm:$0xf] %vm1213, %v1212
        %s1215 = sand.u32 %s181, 1
        %s1216 = scalar_lea.sflag [#allocation9], %s1215
        %s1217 = sand.u32 %s181, 1
        %s1218 = smul.addr %s1217, 4
        %s1219 = scalar_lea.vmem [#allocation8], %s1218
        // Predicated region
        $region49: #{feature_extractor_1dcnn.1} parent=47 // pred_check
          %p1220 = pneg %p191
        $region50: #{feature_extractor_1dcnn.1} parent=47 // pred_check_branch
          %1222 = sbr.rel (%p1220) target = $region52
        $region51: #{feature_extractor_1dcnn.1} parent=47 // pred_region
          %1224 = vsyncadd %s1216, 0
          %s1225 = smul.addr %s21, 4
          %s1226 = scalar_lea.hbm %s7, %s1225
          %s1228 = sshll.u32 %s1219, 4
          %s1229 = int_to_ptr.vmem [resolvable:$true] %s1228
          %s1230 = sshll.u32 %s1226, 4
          %s1231 = int_to_ptr.hbm [resolvable:$true] %s1230
          %1233 = dma.vmem_to_hbm [thread:$0]  %s1229, 64, %s1231, %s1216
        $region52: #{feature_extractor_1dcnn.1} parent=47 // pred_fallthru
          _
      $region48: #{feature_extractor_1dcnn.1} parent=5 // pred_fallthru
        _
      %p1234 = scmp.le.s32.totalorder 2, %s16
      // Predicated region
      $region53: #{feature_extractor_1dcnn.1} parent=5 // pred_check
        %p1235 = pneg %p1234
      $region54: #{feature_extractor_1dcnn.1} parent=5 // pred_check_branch
        %1237 = sbr.rel (%p1235) target = $region56
      $region55: #{feature_extractor_1dcnn.1} parent=5 // pred_region
        %s1238 = ssub.s32 %s16, 2
        // Predicated region
        $region57: #{feature_extractor_1dcnn.1} parent=55 // pred_check
          %p1239 = pneg %p197
        $region58: #{feature_extractor_1dcnn.1} parent=55 // pred_check_branch
          %1241 = sbr.rel (%p1239) target = $region60
        $region59: #{feature_extractor_1dcnn.1} parent=55 // pred_region
          %s1242 = sand.u32 %s182, 1
          %s1243 = scalar_lea.sflag [#allocation9], %s1242
          %s1244 = sand.u32 %s182, 1
          %s1245 = smul.addr %s1244, 4
          %s1246 = scalar_lea.vmem [#allocation8], %s1245
          %1248 = dma.done %s1243, 64
        $region60: #{feature_extractor_1dcnn.1} parent=55 // pred_fallthru
          _
      $region56: #{feature_extractor_1dcnn.1} parent=5 // pred_fallthru
        _
    $region6: #{feature_extractor_1dcnn.1} parent=1 // loop_footer
      %s20 = sadd.s32 1, %s16
    $region7: #{feature_extractor_1dcnn.1} parent=1 // loop_footer_branch
      %15 = sbr.rel target = $region3
    $region8: #{feature_extractor_1dcnn.1} parent=1 // loop_exit
      _
    %1249 = vsyncpa [#allocation9], 1
    %s1250 = scalar_lea.sflag [#allocation9], 1
    %1251 = vsyncpa %s1250, 1

</llo_original>
